<compile_context>
chip_gen: v7x
topology: tpu7x:2x2x1
jax: 0.10.0
libtpu: 0.0.40
codegen_flags: <defaults>
</compile_context>

<pallas_src>
import functools

import jax
import jax.numpy as jnp
from jax.experimental import pallas as pl
from jax.experimental.pallas import tpu as pltpu


def _round_up(x, m):
    return (x + m - 1) // m * m


def _heads_kernel(H, H2, C, out_w,
                  # inputs
                  x_ref,
                  w1_ref, b1_ref,          # fused stage-1 (class/bbox/cut/obj)
                  wb2_ref, bb2_ref,        # bbox MLP hidden layer
                  wc2_ref, bc2_ref,        # class head output layer
                  wb3_ref, bb3_ref,        # bbox MLP output layer
                  wk2_ref, bk2_ref,        # cutting head output layer
                  # output: single lane-dense slab
                  out_ref):
    x = x_ref[...]                                     # (Mblk, H), f32
    mm_dtype = w1_ref.dtype
    xb = x.astype(mm_dtype)                            # one hoisted cast

    def mm(a, w_ref):
        return jnp.dot(a.astype(mm_dtype), w_ref[...],
                       preferred_element_type=jnp.float32)

    # ---- stage 1: one fused matmul for all heads' first layer ----
    z1 = jnp.dot(xb, w1_ref[...],
                 preferred_element_type=jnp.float32) + b1_ref[...]
    a_cls = jnp.maximum(z1[:, 0:H], 0.0)                       # class hidden
    a_bb = jnp.maximum(z1[:, H:2 * H], 0.0)                    # bbox hidden-1
    a_cut = jnp.maximum(z1[:, 2 * H:2 * H + H2], 0.0)          # cutting hidden
    obj = z1[:, 2 * H + H2:2 * H + H2 + 1]                     # objectness (no ReLU)

    # ---- bbox MLP hidden layer 2 ----
    hb = jnp.maximum(mm(a_bb, wb2_ref) + bb2_ref[...], 0.0)

    # ---- final projections ----
    cls = mm(a_cls, wc2_ref) + bc2_ref[...]                    # (Mblk, C)
    raw = mm(hb, wb3_ref) + bb3_ref[...]                       # (Mblk, 4) cx,cy,w,h
    cut = mm(a_cut, wk2_ref) + bk2_ref[...]                    # (Mblk, 1)

    # ---- box decoding (sigmoid / clamp / min size, PyTorch order) ----
    sig = jax.nn.sigmoid(raw)                                  # EUP path
    centers = sig[:, 0:2]                                      # [cx, cy]
    half = sig[:, 2:4] * 0.5                                   # [w/2, h/2]
    lo = jnp.clip(centers - half, 0.0, 1.0)                    # [x1, y1]
    hi = jnp.clip(centers + half, 0.0, 1.0)                    # [x2, y2]
    hi = jnp.maximum(hi, lo + 0.01)                            # min box size

    # ---- single lane-dense output slab: [cls | x1 y1 x2 y2 | cut | obj | 0...] ----
    pieces = [cls, lo, hi, cut, obj]
    used = C + 6
    if out_w > used:
        pieces.append(jnp.zeros((x.shape[0], out_w - used), jnp.float32))
    out_ref[...] = jnp.concatenate(pieces, axis=-1).astype(out_ref.dtype)


def cutting_detection_heads(decoder_output, params, *, num_classes=4,
                            block_rows=512, matmul_dtype=jnp.bfloat16,
                            lane_pad=256):
    """decoder_output: [B, NQ, H] -> dict of head outputs (PyTorch eval semantics)."""
    (wc1, bc1, wc2, bc2,
     wb1, bb1, wb2, bb2, wb3, bb3,
     wk1, bk1, wk2, bk2,
     wo, bo) = params

    B, NQ, H = decoder_output.shape
    H2 = H // 2
    C = num_classes
    M = B * NQ
    x = decoder_output.reshape(M, H).astype(jnp.float32)

    # ---- pack the four stage-1 weights into one lane-dense fused weight ----
    n1 = 2 * H + H2 + 1
    N1 = _round_up(n1, lane_pad)                 # 256-multiple (also OK on v5e)
    w1 = jnp.zeros((H, N1), jnp.float32)
    w1 = w1.at[:, 0:H].set(wc1)
    w1 = w1.at[:, H:2 * H].set(wb1)
    w1 = w1.at[:, 2 * H:2 * H + H2].set(wk1)
    w1 = w1.at[:, 2 * H + H2:n1].set(wo)
    b1 = jnp.zeros((1, N1), jnp.float32)
    b1 = b1.at[:, 0:H].set(bc1)
    b1 = b1.at[:, H:2 * H].set(bb1)
    b1 = b1.at[:, 2 * H:2 * H + H2].set(bk1)
    b1 = b1.at[:, 2 * H + H2:n1].set(bo)

    # pre-cast weights (biases stay f32 for accurate adds; they are tiny)
    w1 = w1.astype(matmul_dtype)
    wb2c = wb2.astype(matmul_dtype)
    wc2c = wc2.astype(matmul_dtype)
    wb3c = wb3.astype(matmul_dtype)
    wk2c = wk2.astype(matmul_dtype)
    consts = (w1, b1, wb2c, bb2, wc2c, bc2, wb3c, bb3, wk2c, bk2)

    # ---- row tiling: multiple of 8, and >= 2 blocks so both v7x TCs get work ----
    target = max(8, _round_up(-(-M // 2), 8))
    Mblk = min(block_rows, target)
    Mpad = _round_up(M, Mblk)
    if Mpad != M:
        x = jnp.pad(x, ((0, Mpad - M), (0, 0)))
    grid = (Mpad // Mblk,)

    OUT_W = max(128, _round_up(C + 6, 128))
    out_dtype = decoder_output.dtype

    row_in_spec = pl.BlockSpec((Mblk, H), lambda i: (i, 0))
    out_spec = pl.BlockSpec((Mblk, OUT_W), lambda i: (i, 0))

    kernel = functools.partial(_heads_kernel, H, H2, C, OUT_W)

    # advisory cost hint
    wbytes = 2 * sum(int(w.size) for w in (w1, wb2c, wc2c, wb3c, wk2c))
    flops = 2 * Mpad * (H * N1 + H * H + H * C + H * 4 + H2 * 1)
    bytes_accessed = 4 * Mpad * H + wbytes + 4 * Mpad * OUT_W
    cost = pl.CostEstimate(flops=flops, transcendentals=8 * Mpad,
                           bytes_accessed=bytes_accessed)

    def _run(pipeline_mode):
        def const_spec(arr):
            if pipeline_mode is None:
                return pl.BlockSpec(arr.shape, lambda i: (0, 0))
            return pl.BlockSpec(arr.shape, lambda i: (0, 0),
                                pipeline_mode=pipeline_mode)

        return pl.pallas_call(
            kernel,
            out_shape=jax.ShapeDtypeStruct((Mpad, OUT_W), out_dtype),
            grid_spec=pltpu.PrefetchScalarGridSpec(
                num_scalar_prefetch=0,
                grid=grid,
                in_specs=[row_in_spec] + [const_spec(a) for a in consts],
                out_specs=out_spec,
            ),
            compiler_params=pltpu.CompilerParams(
                dimension_semantics=("parallel",)),
            cost_estimate=cost,
        )(x, *consts)

    try:
        # constant blocks never change across the row grid -> single-buffer them
        slab = _run(pl.Buffered(1))
    except Exception:
        slab = _run(None)

    slab = slab[:M]
    return {
        "pred_logits": slab[:, 0:C].reshape(B, NQ, C),
        "pred_boxes": slab[:, C:C + 4].reshape(B, NQ, 4),
        "pred_cutting": slab[:, C + 4:C + 5].reshape(B, NQ, 1),
        "pred_objectness": slab[:, C + 5:C + 6].reshape(B, NQ, 1),
    }


def init_params(key, hidden_dim, num_classes=4):
    """Deterministic synthetic parameters (shapes match the PyTorch module).

    Weights are stored pre-transposed as (in_dim, out_dim), biases as (1, out_dim).
    Order: wc1,bc1,wc2,bc2, wb1,bb1,wb2,bb2,wb3,bb3, wk1,bk1,wk2,bk2, wo,bo.
    """
    H = hidden_dim
    keys = jax.random.split(key, 16)
    ki = iter(keys)

    def w(shape):
        return jax.random.normal(next(ki), shape, jnp.float32) * 0.05

    def b(d):
        return jax.random.normal(next(ki), (1, d), jnp.float32) * 0.05

    return (
        # class_head: Linear(H,H) -> ReLU -> Linear(H,C)
        w((H, H)), b(H), w((H, num_classes)), b(num_classes),
        # bbox_embed MLP: Linear(H,H) -> ReLU -> Linear(H,H) -> ReLU -> Linear(H,4)
        w((H, H)), b(H), w((H, H)), b(H), w((H, 4)), b(4),
        # cutting_embed: Linear(H,H//2) -> ReLU -> Dropout -> Linear(H//2,1)
        w((H, H // 2)), b(H // 2), w((H // 2, 1)), b(1),
        # objectness_embed: Linear(H,1)
        w((H, 1)), b(1),
    )


def reference_heads(decoder_output, params, num_classes=4):
    """Pure-JAX f32 reference matching the PyTorch module (eval mode)."""
    (wc1, bc1, wc2, bc2, wb1, bb1, wb2, bb2, wb3, bb3,
     wk1, bk1, wk2, bk2, wo, bo) = params
    x = decoder_output
    h = jax.nn.relu(x @ wc1 + bc1)
    cls = h @ wc2 + bc2
    hb = jax.nn.relu(x @ wb1 + bb1)
    hb = jax.nn.relu(hb @ wb2 + bb2)
    raw = hb @ wb3 + bb3
    sig = jax.nn.sigmoid(raw)
    cx, cy, wd, ht = sig[..., 0], sig[..., 1], sig[..., 2], sig[..., 3]
    x1 = jnp.clip(cx - wd / 2, 0.0, 1.0)
    y1 = jnp.clip(cy - ht / 2, 0.0, 1.0)
    x2 = jnp.clip(cx + wd / 2, 0.0, 1.0)
    y2 = jnp.clip(cy + ht / 2, 0.0, 1.0)
    x2 = jnp.maximum(x2, x1 + 0.01)
    y2 = jnp.maximum(y2, y1 + 0.01)
    box = jnp.stack([x1, y1, x2, y2], axis=-1)
    hk = jax.nn.relu(x @ wk1 + bk1)                 # Dropout = identity (eval)
    cut = hk @ wk2 + bk2
    obj = x @ wo + bo
    return {"pred_logits": cls, "pred_boxes": box,
            "pred_cutting": cut, "pred_objectness": obj}


if __name__ == "__main__":
    B, NQ, H, C = 2, 8, 32, 4

    key = jax.random.PRNGKey(0)
    k_x, k_p = jax.random.split(key)
    decoder_output = jax.random.normal(k_x, (B, NQ, H), jnp.float32)
    params = init_params(k_p, H, C)

    out = cutting_detection_heads(decoder_output, params, num_classes=C)
    out = jax.tree_util.tree_map(jax.block_until_ready, out)

    assert out["pred_logits"].shape == (B, NQ, C)
    assert out["pred_boxes"].shape == (B, NQ, 4)
    assert out["pred_cutting"].shape == (B, NQ, 1)
    assert out["pred_objectness"].shape == (B, NQ, 1)

    # tolerance check vs f32 reference (bf16 MXU inputs, f32 accumulation)
    ref = reference_heads(decoder_output, params, C)
    for k in ("pred_logits", "pred_boxes", "pred_cutting", "pred_objectness"):
        err = float(jnp.max(jnp.abs(out[k] - ref[k])))
        assert err < 5e-2, f"{k}: max abs err {err}"

    boxes = out["pred_boxes"]
    assert bool(jnp.all(boxes[..., 2] >= boxes[..., 0]))   # x2 >= x1
    assert bool(jnp.all(boxes[..., 3] >= boxes[..., 1]))   # y2 >= y1
    print("KERNEL_OK")
</pallas_src>

<mosaic_0001>
module attributes {stable_mosaic.version = 11 : i64} {
  func.func @_heads_kernel(%arg0: i32, %arg1: memref<8x32xf32, #tpu.memory_space<vmem>>, %arg2: memref<32x256xbf16, #tpu.memory_space<vmem>>, %arg3: memref<1x256xf32, #tpu.memory_space<vmem>>, %arg4: memref<32x32xbf16, #tpu.memory_space<vmem>>, %arg5: memref<1x32xf32, #tpu.memory_space<vmem>>, %arg6: memref<32x4xbf16, #tpu.memory_space<vmem>>, %arg7: memref<1x4xf32, #tpu.memory_space<vmem>>, %arg8: memref<32x4xbf16, #tpu.memory_space<vmem>>, %arg9: memref<1x4xf32, #tpu.memory_space<vmem>>, %arg10: memref<16x1xbf16, #tpu.memory_space<vmem>>, %arg11: memref<1x1xf32, #tpu.memory_space<vmem>>, %arg12: memref<8x128xf32, #tpu.memory_space<vmem>>) attributes {dimension_semantics = [#tpu.dimension_semantics<parallel>], iteration_bounds = array<i64: 2>, scalar_prefetch = 0 : i64, scratch_operands = 0 : i64, tpu.core_type = #tpu.core_type<tc>, window_params = [{transform_indices = @transform_0, window_bounds = array<i64: 8, 32>}, {pipeline_mode = #tpu.pipeline_mode<synchronous>, transform_indices = @transform_1, window_bounds = array<i64: 32, 256>}, {pipeline_mode = #tpu.pipeline_mode<synchronous>, transform_indices = @transform_2, window_bounds = array<i64: 1, 256>}, {pipeline_mode = #tpu.pipeline_mode<synchronous>, transform_indices = @transform_3, window_bounds = array<i64: 32, 32>}, {pipeline_mode = #tpu.pipeline_mode<synchronous>, transform_indices = @transform_4, window_bounds = array<i64: 1, 32>}, {pipeline_mode = #tpu.pipeline_mode<synchronous>, transform_indices = @transform_5, window_bounds = array<i64: 32, 4>}, {pipeline_mode = #tpu.pipeline_mode<synchronous>, transform_indices = @transform_6, window_bounds = array<i64: 1, 4>}, {pipeline_mode = #tpu.pipeline_mode<synchronous>, transform_indices = @transform_7, window_bounds = array<i64: 32, 4>}, {pipeline_mode = #tpu.pipeline_mode<synchronous>, transform_indices = @transform_8, window_bounds = array<i64: 1, 4>}, {pipeline_mode = #tpu.pipeline_mode<synchronous>, transform_indices = @transform_9, window_bounds = array<i64: 16, 1>}, {pipeline_mode = #tpu.pipeline_mode<synchronous>, transform_indices = @transform_10, window_bounds = array<i64: 1, 1>}, {transform_indices = @transform_11, window_bounds = array<i64: 8, 128>}]} {
    %c0 = arith.constant 0 : index
    %c0_0 = arith.constant 0 : index
    %0 = vector.load %arg1[%c0, %c0_0] : memref<8x32xf32, #tpu.memory_space<vmem>>, vector<8x32xf32>
    %1 = arith.truncf %0 : vector<8x32xf32> to vector<8x32xbf16>
    %c0_1 = arith.constant 0 : index
    %c0_2 = arith.constant 0 : index
    %2 = vector.load %arg2[%c0_1, %c0_2] : memref<32x256xbf16, #tpu.memory_space<vmem>>, vector<32x256xbf16>
    %cst = arith.constant dense<0.000000e+00> : vector<8x256xf32>
    %3 = tpu.matmul %1, %2, %cst {dimension_numbers = #tpu.dot_dimension_numbers<[1], [0], [0], [1], [0, 0, 1, 1], [], []>} : vector<8x32xbf16>, vector<32x256xbf16>, vector<8x256xf32> -> vector<8x256xf32>
    %c0_3 = arith.constant 0 : index
    %c0_4 = arith.constant 0 : index
    %4 = vector.load %arg3[%c0_3, %c0_4] : memref<1x256xf32, #tpu.memory_space<vmem>>, vector<1x256xf32>
    %5 = vector.broadcast %4 : vector<1x256xf32> to vector<8x256xf32>
    %6 = arith.addf %3, %5 : vector<8x256xf32>
    %7 = vector.extract_strided_slice %6 {offsets = [0, 0], sizes = [8, 32], strides = [1, 1]} : vector<8x256xf32> to vector<8x32xf32>
    %cst_5 = arith.constant 0.000000e+00 : f32
    %8 = vector.broadcast %cst_5 : f32 to vector<8x32xf32>
    %9 = arith.maximumf %7, %8 : vector<8x32xf32>
    %10 = vector.extract_strided_slice %6 {offsets = [0, 32], sizes = [8, 32], strides = [1, 1]} : vector<8x256xf32> to vector<8x32xf32>
    %cst_6 = arith.constant 0.000000e+00 : f32
    %11 = vector.broadcast %cst_6 : f32 to vector<8x32xf32>
    %12 = arith.maximumf %10, %11 : vector<8x32xf32>
    %13 = vector.extract_strided_slice %6 {offsets = [0, 64], sizes = [8, 16], strides = [1, 1]} : vector<8x256xf32> to vector<8x16xf32>
    %cst_7 = arith.constant 0.000000e+00 : f32
    %14 = vector.broadcast %cst_7 : f32 to vector<8x16xf32>
    %15 = arith.maximumf %13, %14 : vector<8x16xf32>
    %16 = vector.extract_strided_slice %6 {offsets = [0, 80], sizes = [8, 1], strides = [1, 1]} : vector<8x256xf32> to vector<8x1xf32>
    %17 = arith.truncf %12 : vector<8x32xf32> to vector<8x32xbf16>
    %c0_8 = arith.constant 0 : index
    %c0_9 = arith.constant 0 : index
    %18 = vector.load %arg4[%c0_8, %c0_9] : memref<32x32xbf16, #tpu.memory_space<vmem>>, vector<32x32xbf16>
    %cst_10 = arith.constant dense<0.000000e+00> : vector<8x32xf32>
    %19 = tpu.matmul %17, %18, %cst_10 {dimension_numbers = #tpu.dot_dimension_numbers<[1], [0], [0], [1], [0, 0, 1, 1], [], []>} : vector<8x32xbf16>, vector<32x32xbf16>, vector<8x32xf32> -> vector<8x32xf32>
    %c0_11 = arith.constant 0 : index
    %c0_12 = arith.constant 0 : index
    %20 = vector.load %arg5[%c0_11, %c0_12] : memref<1x32xf32, #tpu.memory_space<vmem>>, vector<1x32xf32>
    %21 = vector.broadcast %20 : vector<1x32xf32> to vector<8x32xf32>
    %22 = arith.addf %19, %21 : vector<8x32xf32>
    %cst_13 = arith.constant 0.000000e+00 : f32
    %23 = vector.broadcast %cst_13 : f32 to vector<8x32xf32>
    %24 = arith.maximumf %22, %23 : vector<8x32xf32>
    %25 = arith.truncf %9 : vector<8x32xf32> to vector<8x32xbf16>
    %c0_14 = arith.constant 0 : index
    %c0_15 = arith.constant 0 : index
    %26 = vector.load %arg6[%c0_14, %c0_15] : memref<32x4xbf16, #tpu.memory_space<vmem>>, vector<32x4xbf16>
    %cst_16 = arith.constant dense<0.000000e+00> : vector<8x4xf32>
    %27 = tpu.matmul %25, %26, %cst_16 {dimension_numbers = #tpu.dot_dimension_numbers<[1], [0], [0], [1], [0, 0, 1, 1], [], []>} : vector<8x32xbf16>, vector<32x4xbf16>, vector<8x4xf32> -> vector<8x4xf32>
    %c0_17 = arith.constant 0 : index
    %c0_18 = arith.constant 0 : index
    %28 = vector.load %arg7[%c0_17, %c0_18] : memref<1x4xf32, #tpu.memory_space<vmem>>, vector<1x4xf32>
    %29 = vector.broadcast %28 : vector<1x4xf32> to vector<8x4xf32>
    %30 = arith.addf %27, %29 : vector<8x4xf32>
    %31 = arith.truncf %24 : vector<8x32xf32> to vector<8x32xbf16>
    %c0_19 = arith.constant 0 : index
    %c0_20 = arith.constant 0 : index
    %32 = vector.load %arg8[%c0_19, %c0_20] : memref<32x4xbf16, #tpu.memory_space<vmem>>, vector<32x4xbf16>
    %cst_21 = arith.constant dense<0.000000e+00> : vector<8x4xf32>
    %33 = tpu.matmul %31, %32, %cst_21 {dimension_numbers = #tpu.dot_dimension_numbers<[1], [0], [0], [1], [0, 0, 1, 1], [], []>} : vector<8x32xbf16>, vector<32x4xbf16>, vector<8x4xf32> -> vector<8x4xf32>
    %c0_22 = arith.constant 0 : index
    %c0_23 = arith.constant 0 : index
    %34 = vector.load %arg9[%c0_22, %c0_23] : memref<1x4xf32, #tpu.memory_space<vmem>>, vector<1x4xf32>
    %35 = vector.broadcast %34 : vector<1x4xf32> to vector<8x4xf32>
    %36 = arith.addf %33, %35 : vector<8x4xf32>
    %37 = arith.truncf %15 : vector<8x16xf32> to vector<8x16xbf16>
    %c0_24 = arith.constant 0 : index
    %c0_25 = arith.constant 0 : index
    %38 = vector.load %arg10[%c0_24, %c0_25] : memref<16x1xbf16, #tpu.memory_space<vmem>>, vector<16x1xbf16>
    %cst_26 = arith.constant dense<0.000000e+00> : vector<8x1xf32>
    %39 = tpu.matmul %37, %38, %cst_26 {dimension_numbers = #tpu.dot_dimension_numbers<[1], [0], [0], [1], [0, 0, 1, 1], [], []>} : vector<8x16xbf16>, vector<16x1xbf16>, vector<8x1xf32> -> vector<8x1xf32>
    %c0_27 = arith.constant 0 : index
    %c0_28 = arith.constant 0 : index
    %40 = vector.load %arg11[%c0_27, %c0_28] : memref<1x1xf32, #tpu.memory_space<vmem>>, vector<1x1xf32>
    %41 = vector.broadcast %40 : vector<1x1xf32> to vector<8x1xf32>
    %42 = arith.addf %39, %41 : vector<8x1xf32>
    %43 = arith.negf %36 : vector<8x4xf32>
    %44 = math.exp %43 : vector<8x4xf32>
    %cst_29 = arith.constant 1.000000e+00 : f32
    %45 = vector.broadcast %cst_29 : f32 to vector<8x4xf32>
    %46 = arith.addf %45, %44 : vector<8x4xf32>
    %47 = arith.divf %45, %46 : vector<8x4xf32>
    %48 = vector.extract_strided_slice %47 {offsets = [0, 0], sizes = [8, 2], strides = [1, 1]} : vector<8x4xf32> to vector<8x2xf32>
    %49 = vector.extract_strided_slice %47 {offsets = [0, 2], sizes = [8, 2], strides = [1, 1]} : vector<8x4xf32> to vector<8x2xf32>
    %cst_30 = arith.constant 5.000000e-01 : f32
    %50 = vector.broadcast %cst_30 : f32 to vector<8x2xf32>
    %51 = arith.mulf %49, %50 : vector<8x2xf32>
    %52 = arith.subf %48, %51 : vector<8x2xf32>
    %cst_31 = arith.constant 0.000000e+00 : f32
    %cst_32 = arith.constant 1.000000e+00 : f32
    %53 = vector.broadcast %cst_31 : f32 to vector<8x2xf32>
    %54 = arith.maximumf %53, %52 : vector<8x2xf32>
    %55 = vector.broadcast %cst_32 : f32 to vector<8x2xf32>
    %56 = arith.minimumf %55, %54 : vector<8x2xf32>
    %57 = arith.addf %48, %51 : vector<8x2xf32>
    %cst_33 = arith.constant 0.000000e+00 : f32
    %cst_34 = arith.constant 1.000000e+00 : f32
    %58 = vector.broadcast %cst_33 : f32 to vector<8x2xf32>
    %59 = arith.maximumf %58, %57 : vector<8x2xf32>
    %60 = vector.broadcast %cst_34 : f32 to vector<8x2xf32>
    %61 = arith.minimumf %60, %59 : vector<8x2xf32>
    %cst_35 = arith.constant 0.00999999977 : f32
    %62 = vector.broadcast %cst_35 : f32 to vector<8x2xf32>
    %63 = arith.addf %56, %62 : vector<8x2xf32>
    %64 = arith.maximumf %61, %63 : vector<8x2xf32>
    %cst_36 = arith.constant 0.000000e+00 : f32
    %65 = vector.broadcast %cst_36 : f32 to vector<8x118xf32>
    %66 = tpu.concatenate %30, %56, %64, %42, %16, %65 in 1 : vector<8x4xf32>, vector<8x2xf32>, vector<8x2xf32>, vector<8x1xf32>, vector<8x1xf32>, vector<8x118xf32> -> vector<8x128xf32>
    %c0_37 = arith.constant 0 : index
    %c0_38 = arith.constant 0 : index
    %67 = vector.load %arg12[%c0_37, %c0_38] : memref<8x128xf32, #tpu.memory_space<vmem>>, vector<8x128xf32>
    tpu.vector_store %arg12[%c0_37, %c0_38], %66 {strides = array<i32>} : memref<8x128xf32, #tpu.memory_space<vmem>>, vector<8x128xf32>,
    return
  }
  func.func @transform_0(%arg0: i32) -> (i32, i32) {
    %c0_i32 = arith.constant 0 : i32
    %c0_i32_0 = arith.constant 0 : i32
    return %arg0, %c0_i32 : i32, i32
  }
  func.func @transform_1(%arg0: i32) -> (i32, i32) {
    %c0_i32 = arith.constant 0 : i32
    %c0_i32_0 = arith.constant 0 : i32
    %c0_i32_1 = arith.constant 0 : i32
    return %c0_i32, %c0_i32_0 : i32, i32
  }
  func.func @transform_2(%arg0: i32) -> (i32, i32) {
    %c0_i32 = arith.constant 0 : i32
    %c0_i32_0 = arith.constant 0 : i32
    %c0_i32_1 = arith.constant 0 : i32
    return %c0_i32, %c0_i32_0 : i32, i32
  }
  func.func @transform_3(%arg0: i32) -> (i32, i32) {
    %c0_i32 = arith.constant 0 : i32
    %c0_i32_0 = arith.constant 0 : i32
    %c0_i32_1 = arith.constant 0 : i32
    return %c0_i32, %c0_i32_0 : i32, i32
  }
  func.func @transform_4(%arg0: i32) -> (i32, i32) {
    %c0_i32 = arith.constant 0 : i32
    %c0_i32_0 = arith.constant 0 : i32
    %c0_i32_1 = arith.constant 0 : i32
    return %c0_i32, %c0_i32_0 : i32, i32
  }
  func.func @transform_5(%arg0: i32) -> (i32, i32) {
    %c0_i32 = arith.constant 0 : i32
    %c0_i32_0 = arith.constant 0 : i32
    %c0_i32_1 = arith.constant 0 : i32
    return %c0_i32, %c0_i32_0 : i32, i32
  }
  func.func @transform_6(%arg0: i32) -> (i32, i32) {
    %c0_i32 = arith.constant 0 : i32
    %c0_i32_0 = arith.constant 0 : i32
    %c0_i32_1 = arith.constant 0 : i32
    return %c0_i32, %c0_i32_0 : i32, i32
  }
  func.func @transform_7(%arg0: i32) -> (i32, i32) {
    %c0_i32 = arith.constant 0 : i32
    %c0_i32_0 = arith.constant 0 : i32
    %c0_i32_1 = arith.constant 0 : i32
    return %c0_i32, %c0_i32_0 : i32, i32
  }
  func.func @transform_8(%arg0: i32) -> (i32, i32) {
    %c0_i32 = arith.constant 0 : i32
    %c0_i32_0 = arith.constant 0 : i32
    %c0_i32_1 = arith.constant 0 : i32
    return %c0_i32, %c0_i32_0 : i32, i32
  }
  func.func @transform_9(%arg0: i32) -> (i32, i32) {
    %c0_i32 = arith.constant 0 : i32
    %c0_i32_0 = arith.constant 0 : i32
    %c0_i32_1 = arith.constant 0 : i32
    return %c0_i32, %c0_i32_0 : i32, i32
  }
  func.func @transform_10(%arg0: i32) -> (i32, i32) {
    %c0_i32 = arith.constant 0 : i32
    %c0_i32_0 = arith.constant 0 : i32
    %c0_i32_1 = arith.constant 0 : i32
    return %c0_i32, %c0_i32_0 : i32, i32
  }
  func.func @transform_11(%arg0: i32) -> (i32, i32) {
    %c0_i32 = arith.constant 0 : i32
    %c0_i32_0 = arith.constant 0 : i32
    return %arg0, %c0_i32 : i32, i32
  }
}

module attributes {stable_mosaic.version = 11 : i64} {
  func.func @_heads_kernel(%arg0: i32, %arg1: memref<8x32xf32, #tpu.memory_space<vmem>>, %arg2: memref<32x256xbf16, #tpu.memory_space<vmem>>, %arg3: memref<1x256xf32, #tpu.memory_space<vmem>>, %arg4: memref<32x32xbf16, #tpu.memory_space<vmem>>, %arg5: memref<1x32xf32, #tpu.memory_space<vmem>>, %arg6: memref<32x4xbf16, #tpu.memory_space<vmem>>, %arg7: memref<1x4xf32, #tpu.memory_space<vmem>>, %arg8: memref<32x4xbf16, #tpu.memory_space<vmem>>, %arg9: memref<1x4xf32, #tpu.memory_space<vmem>>, %arg10: memref<16x1xbf16, #tpu.memory_space<vmem>>, %arg11: memref<1x1xf32, #tpu.memory_space<vmem>>, %arg12: memref<8x128xf32, #tpu.memory_space<vmem>>) attributes {dimension_semantics = [#tpu.dimension_semantics<parallel>], iteration_bounds = array<i64: 2>, scalar_prefetch = 0 : i64, scratch_operands = 0 : i64, tpu.core_type = #tpu.core_type<tc>, window_params = [{transform_indices = @transform_0, window_bounds = array<i64: 8, 32>}, {pipeline_mode = #tpu.pipeline_mode<synchronous>, transform_indices = @transform_1, window_bounds = array<i64: 32, 256>}, {pipeline_mode = #tpu.pipeline_mode<synchronous>, transform_indices = @transform_2, window_bounds = array<i64: 1, 256>}, {pipeline_mode = #tpu.pipeline_mode<synchronous>, transform_indices = @transform_3, window_bounds = array<i64: 32, 32>}, {pipeline_mode = #tpu.pipeline_mode<synchronous>, transform_indices = @transform_4, window_bounds = array<i64: 1, 32>}, {pipeline_mode = #tpu.pipeline_mode<synchronous>, transform_indices = @transform_5, window_bounds = array<i64: 32, 4>}, {pipeline_mode = #tpu.pipeline_mode<synchronous>, transform_indices = @transform_6, window_bounds = array<i64: 1, 4>}, {pipeline_mode = #tpu.pipeline_mode<synchronous>, transform_indices = @transform_7, window_bounds = array<i64: 32, 4>}, {pipeline_mode = #tpu.pipeline_mode<synchronous>, transform_indices = @transform_8, window_bounds = array<i64: 1, 4>}, {pipeline_mode = #tpu.pipeline_mode<synchronous>, transform_indices = @transform_9, window_bounds = array<i64: 16, 1>}, {pipeline_mode = #tpu.pipeline_mode<synchronous>, transform_indices = @transform_10, window_bounds = array<i64: 1, 1>}, {transform_indices = @transform_11, window_bounds = array<i64: 8, 128>}]} {
    %c0 = arith.constant 0 : index
    %c0_0 = arith.constant 0 : index
    %0 = vector.load %arg1[%c0, %c0_0] : memref<8x32xf32, #tpu.memory_space<vmem>>, vector<8x32xf32>
    %1 = arith.truncf %0 : vector<8x32xf32> to vector<8x32xbf16>
    %c0_1 = arith.constant 0 : index
    %c0_2 = arith.constant 0 : index
    %2 = vector.load %arg2[%c0_1, %c0_2] : memref<32x256xbf16, #tpu.memory_space<vmem>>, vector<32x256xbf16>
    %cst = arith.constant dense<0.000000e+00> : vector<8x256xf32>
    %3 = tpu.matmul %1, %2, %cst {dimension_numbers = #tpu.dot_dimension_numbers<[1], [0], [0], [1], [0, 0, 1, 1], [], []>} : vector<8x32xbf16>, vector<32x256xbf16>, vector<8x256xf32> -> vector<8x256xf32>
    %c0_3 = arith.constant 0 : index
    %c0_4 = arith.constant 0 : index
    %4 = vector.load %arg3[%c0_3, %c0_4] : memref<1x256xf32, #tpu.memory_space<vmem>>, vector<1x256xf32>
    %5 = vector.broadcast %4 : vector<1x256xf32> to vector<8x256xf32>
    %6 = arith.addf %3, %5 : vector<8x256xf32>
    %7 = vector.extract_strided_slice %6 {offsets = [0, 0], sizes = [8, 32], strides = [1, 1]} : vector<8x256xf32> to vector<8x32xf32>
    %cst_5 = arith.constant 0.000000e+00 : f32
    %8 = vector.broadcast %cst_5 : f32 to vector<8x32xf32>
    %9 = arith.maximumf %7, %8 : vector<8x32xf32>
    %10 = vector.extract_strided_slice %6 {offsets = [0, 32], sizes = [8, 32], strides = [1, 1]} : vector<8x256xf32> to vector<8x32xf32>
    %cst_6 = arith.constant 0.000000e+00 : f32
    %11 = vector.broadcast %cst_6 : f32 to vector<8x32xf32>
    %12 = arith.maximumf %10, %11 : vector<8x32xf32>
    %13 = vector.extract_strided_slice %6 {offsets = [0, 64], sizes = [8, 16], strides = [1, 1]} : vector<8x256xf32> to vector<8x16xf32>
    %cst_7 = arith.constant 0.000000e+00 : f32
    %14 = vector.broadcast %cst_7 : f32 to vector<8x16xf32>
    %15 = arith.maximumf %13, %14 : vector<8x16xf32>
    %16 = vector.extract_strided_slice %6 {offsets = [0, 80], sizes = [8, 1], strides = [1, 1]} : vector<8x256xf32> to vector<8x1xf32>
    %17 = arith.truncf %12 : vector<8x32xf32> to vector<8x32xbf16>
    %c0_8 = arith.constant 0 : index
    %c0_9 = arith.constant 0 : index
    %18 = vector.load %arg4[%c0_8, %c0_9] : memref<32x32xbf16, #tpu.memory_space<vmem>>, vector<32x32xbf16>
    %cst_10 = arith.constant dense<0.000000e+00> : vector<8x32xf32>
    %19 = tpu.matmul %17, %18, %cst_10 {dimension_numbers = #tpu.dot_dimension_numbers<[1], [0], [0], [1], [0, 0, 1, 1], [], []>} : vector<8x32xbf16>, vector<32x32xbf16>, vector<8x32xf32> -> vector<8x32xf32>
    %c0_11 = arith.constant 0 : index
    %c0_12 = arith.constant 0 : index
    %20 = vector.load %arg5[%c0_11, %c0_12] : memref<1x32xf32, #tpu.memory_space<vmem>>, vector<1x32xf32>
    %21 = vector.broadcast %20 : vector<1x32xf32> to vector<8x32xf32>
    %22 = arith.addf %19, %21 : vector<8x32xf32>
    %cst_13 = arith.constant 0.000000e+00 : f32
    %23 = vector.broadcast %cst_13 : f32 to vector<8x32xf32>
    %24 = arith.maximumf %22, %23 : vector<8x32xf32>
    %25 = arith.truncf %9 : vector<8x32xf32> to vector<8x32xbf16>
    %c0_14 = arith.constant 0 : index
    %c0_15 = arith.constant 0 : index
    %26 = vector.load %arg6[%c0_14, %c0_15] : memref<32x4xbf16, #tpu.memory_space<vmem>>, vector<32x4xbf16>
    %cst_16 = arith.constant dense<0.000000e+00> : vector<8x4xf32>
    %27 = tpu.matmul %25, %26, %cst_16 {dimension_numbers = #tpu.dot_dimension_numbers<[1], [0], [0], [1], [0, 0, 1, 1], [], []>} : vector<8x32xbf16>, vector<32x4xbf16>, vector<8x4xf32> -> vector<8x4xf32>
    %c0_17 = arith.constant 0 : index
    %c0_18 = arith.constant 0 : index
    %28 = vector.load %arg7[%c0_17, %c0_18] : memref<1x4xf32, #tpu.memory_space<vmem>>, vector<1x4xf32>
    %29 = vector.broadcast %28 : vector<1x4xf32> to vector<8x4xf32>
    %30 = arith.addf %27, %29 : vector<8x4xf32>
    %31 = arith.truncf %24 : vector<8x32xf32> to vector<8x32xbf16>
    %c0_19 = arith.constant 0 : index
    %c0_20 = arith.constant 0 : index
    %32 = vector.load %arg8[%c0_19, %c0_20] : memref<32x4xbf16, #tpu.memory_space<vmem>>, vector<32x4xbf16>
    %cst_21 = arith.constant dense<0.000000e+00> : vector<8x4xf32>
    %33 = tpu.matmul %31, %32, %cst_21 {dimension_numbers = #tpu.dot_dimension_numbers<[1], [0], [0], [1], [0, 0, 1, 1], [], []>} : vector<8x32xbf16>, vector<32x4xbf16>, vector<8x4xf32> -> vector<8x4xf32>
    %c0_22 = arith.constant 0 : index
    %c0_23 = arith.constant 0 : index
    %34 = vector.load %arg9[%c0_22, %c0_23] : memref<1x4xf32, #tpu.memory_space<vmem>>, vector<1x4xf32>
    %35 = vector.broadcast %34 : vector<1x4xf32> to vector<8x4xf32>
    %36 = arith.addf %33, %35 : vector<8x4xf32>
    %37 = arith.truncf %15 : vector<8x16xf32> to vector<8x16xbf16>
    %c0_24 = arith.constant 0 : index
    %c0_25 = arith.constant 0 : index
    %38 = vector.load %arg10[%c0_24, %c0_25] : memref<16x1xbf16, #tpu.memory_space<vmem>>, vector<16x1xbf16>
    %cst_26 = arith.constant dense<0.000000e+00> : vector<8x1xf32>
    %39 = tpu.matmul %37, %38, %cst_26 {dimension_numbers = #tpu.dot_dimension_numbers<[1], [0], [0], [1], [0, 0, 1, 1], [], []>} : vector<8x16xbf16>, vector<16x1xbf16>, vector<8x1xf32> -> vector<8x1xf32>
    %c0_27 = arith.constant 0 : index
    %c0_28 = arith.constant 0 : index
    %40 = vector.load %arg11[%c0_27, %c0_28] : memref<1x1xf32, #tpu.memory_space<vmem>>, vector<1x1xf32>
    %41 = vector.broadcast %40 : vector<1x1xf32> to vector<8x1xf32>
    %42 = arith.addf %39, %41 : vector<8x1xf32>
    %43 = arith.negf %36 : vector<8x4xf32>
    %44 = math.exp %43 : vector<8x4xf32>
    %cst_29 = arith.constant 1.000000e+00 : f32
    %45 = vector.broadcast %cst_29 : f32 to vector<8x4xf32>
    %46 = arith.addf %45, %44 : vector<8x4xf32>
    %47 = arith.divf %45, %46 : vector<8x4xf32>
    %48 = vector.extract_strided_slice %47 {offsets = [0, 0], sizes = [8, 2], strides = [1, 1]} : vector<8x4xf32> to vector<8x2xf32>
    %49 = vector.extract_strided_slice %47 {offsets = [0, 2], sizes = [8, 2], strides = [1, 1]} : vector<8x4xf32> to vector<8x2xf32>
    %cst_30 = arith.constant 5.000000e-01 : f32
    %50 = vector.broadcast %cst_30 : f32 to vector<8x2xf32>
    %51 = arith.mulf %49, %50 : vector<8x2xf32>
    %52 = arith.subf %48, %51 : vector<8x2xf32>
    %cst_31 = arith.constant 0.000000e+00 : f32
    %cst_32 = arith.constant 1.000000e+00 : f32
    %53 = vector.broadcast %cst_31 : f32 to vector<8x2xf32>
    %54 = arith.maximumf %53, %52 : vector<8x2xf32>
    %55 = vector.broadcast %cst_32 : f32 to vector<8x2xf32>
    %56 = arith.minimumf %55, %54 : vector<8x2xf32>
    %57 = arith.addf %48, %51 : vector<8x2xf32>
    %cst_33 = arith.constant 0.000000e+00 : f32
    %cst_34 = arith.constant 1.000000e+00 : f32
    %58 = vector.broadcast %cst_33 : f32 to vector<8x2xf32>
    %59 = arith.maximumf %58, %57 : vector<8x2xf32>
    %60 = vector.broadcast %cst_34 : f32 to vector<8x2xf32>
    %61 = arith.minimumf %60, %59 : vector<8x2xf32>
    %cst_35 = arith.constant 0.00999999977 : f32
    %62 = vector.broadcast %cst_35 : f32 to vector<8x2xf32>
    %63 = arith.addf %56, %62 : vector<8x2xf32>
    %64 = arith.maximumf %61, %63 : vector<8x2xf32>
    %cst_36 = arith.constant 0.000000e+00 : f32
    %65 = vector.broadcast %cst_36 : f32 to vector<8x118xf32>
    %66 = tpu.concatenate %30, %56, %64, %42, %16, %65 in 1 : vector<8x4xf32>, vector<8x2xf32>, vector<8x2xf32>, vector<8x1xf32>, vector<8x1xf32>, vector<8x118xf32> -> vector<8x128xf32>
    %c0_37 = arith.constant 0 : index
    %c0_38 = arith.constant 0 : index
    %67 = vector.load %arg12[%c0_37, %c0_38] : memref<8x128xf32, #tpu.memory_space<vmem>>, vector<8x128xf32>
    tpu.vector_store %arg12[%c0_37, %c0_38], %66 {strides = array<i32>} : memref<8x128xf32, #tpu.memory_space<vmem>>, vector<8x128xf32>,
    return
  }
  func.func @transform_0(%arg0: i32) -> (i32, i32) {
    %c0_i32 = arith.constant 0 : i32
    %c0_i32_0 = arith.constant 0 : i32
    return %arg0, %c0_i32 : i32, i32
  }
  func.func @transform_1(%arg0: i32) -> (i32, i32) {
    %c0_i32 = arith.constant 0 : i32
    %c0_i32_0 = arith.constant 0 : i32
    %c0_i32_1 = arith.constant 0 : i32
    return %c0_i32, %c0_i32_0 : i32, i32
  }
  func.func @transform_2(%arg0: i32) -> (i32, i32) {
    %c0_i32 = arith.constant 0 : i32
    %c0_i32_0 = arith.constant 0 : i32
    %c0_i32_1 = arith.constant 0 : i32
    return %c0_i32, %c0_i32_0 : i32, i32
  }
  func.func @transform_3(%arg0: i32) -> (i32, i32) {
    %c0_i32 = arith.constant 0 : i32
    %c0_i32_0 = arith.constant 0 : i32
    %c0_i32_1 = arith.constant 0 : i32
    return %c0_i32, %c0_i32_0 : i32, i32
  }
  func.func @transform_4(%arg0: i32) -> (i32, i32) {
    %c0_i32 = arith.constant 0 : i32
    %c0_i32_0 = arith.constant 0 : i32
    %c0_i32_1 = arith.constant 0 : i32
    return %c0_i32, %c0_i32_0 : i32, i32
  }
  func.func @transform_5(%arg0: i32) -> (i32, i32) {
    %c0_i32 = arith.constant 0 : i32
    %c0_i32_0 = arith.constant 0 : i32
    %c0_i32_1 = arith.constant 0 : i32
    return %c0_i32, %c0_i32_0 : i32, i32
  }
  func.func @transform_6(%arg0: i32) -> (i32, i32) {
    %c0_i32 = arith.constant 0 : i32
    %c0_i32_0 = arith.constant 0 : i32
    %c0_i32_1 = arith.constant 0 : i32
    return %c0_i32, %c0_i32_0 : i32, i32
  }
  func.func @transform_7(%arg0: i32) -> (i32, i32) {
    %c0_i32 = arith.constant 0 : i32
    %c0_i32_0 = arith.constant 0 : i32
    %c0_i32_1 = arith.constant 0 : i32
    return %c0_i32, %c0_i32_0 : i32, i32
  }
  func.func @transform_8(%arg0: i32) -> (i32, i32) {
    %c0_i32 = arith.constant 0 : i32
    %c0_i32_0 = arith.constant 0 : i32
    %c0_i32_1 = arith.constant 0 : i32
    return %c0_i32, %c0_i32_0 : i32, i32
  }
  func.func @transform_9(%arg0: i32) -> (i32, i32) {
    %c0_i32 = arith.constant 0 : i32
    %c0_i32_0 = arith.constant 0 : i32
    %c0_i32_1 = arith.constant 0 : i32
    return %c0_i32, %c0_i32_0 : i32, i32
  }
  func.func @transform_10(%arg0: i32) -> (i32, i32) {
    %c0_i32 = arith.constant 0 : i32
    %c0_i32_0 = arith.constant 0 : i32
    %c0_i32_1 = arith.constant 0 : i32
    return %c0_i32, %c0_i32_0 : i32, i32
  }
  func.func @transform_11(%arg0: i32) -> (i32, i32) {
    %c0_i32 = arith.constant 0 : i32
    %c0_i32_0 = arith.constant 0 : i32
    return %arg0, %c0_i32 : i32, i32
  }
}

</mosaic_0001>

<llo_original>
// kernel: tpu_custom_call.1
$region0: #{tpu_custom_call.1}
  #allocation0 [shape = 'u32[]', space=smem, size = 0x4, offset = 0x4, fixed_abs, tag = 'smem constant byte address 0x4 - core index']
  #allocation1 [shape = 'u32[144,128]{1,0:T(1,128)}', space=vmem, size = 0x12000, scoped, tag = 'internal scratch']
  #allocation2 [shape = 'f32[1,1]{1,0:T(1,128)S(1)}', space=vmem, size = 0x200, scoped, tag = 'scoped memory for tpu_custom_call.1']
  %s0 = inlined_call_operand.vmem [shape: f32[16,32], index: 0, kind: input, shape index: {}]
  %s1 = inlined_call_operand.vmem [shape: bf16[32,256], index: 1, kind: input, shape index: {}]
  %s2 = inlined_call_operand.vmem [shape: f32[1,256], index: 2, kind: input, shape index: {}]
  %s3 = inlined_call_operand.hbm [shape: bf16[32,32], index: 3, kind: input, shape index: {}]
  %s4 = inlined_call_operand.vmem [shape: f32[1,32], index: 4, kind: input, shape index: {}]
  %s5 = inlined_call_operand.vmem [shape: bf16[32,4], index: 5, kind: input, shape index: {}]
  %s6 = inlined_call_operand.vmem [shape: f32[1,4], index: 6, kind: input, shape index: {}]
  %s7 = inlined_call_operand.vmem [shape: bf16[32,4], index: 7, kind: input, shape index: {}]
  %s8 = inlined_call_operand.vmem [shape: f32[1,4], index: 8, kind: input, shape index: {}]
  %s9 = inlined_call_operand.vmem [shape: bf16[16,1], index: 9, kind: input, shape index: {}]
  %s10 = inlined_call_operand.<no memory space> [shape: f32[1,1], index: 10, kind: input, shape index: {}]
  %s11 = inlined_call_operand.hbm [shape: f32[16,128], index: 11, kind: output, shape index: {}]
  %s12 = sld [smem:[#allocation0]]
  $region81: #{tpu_custom_call.1} parent=0
    _
  %s14 = ssub.s32 1, %s12
  %s15 = scalar_select 0, %s14, %s12
  %v16 = vstv %s10
  %17 = vst [vmem:[#allocation2] sm:$0x1] %v16
  $region1: #{tpu_custom_call.1} parent=0
    #allocation3 [shape = 'u8[8192]{0}', space=vmem, size = 0x2000, scoped, tag = 'input window, operand 3, single buffered']
    #allocation4 [shape = 's32[2]{0}', space=sflag, size = 0x8, scoped, tag = 'scoped memory for tpu_custom_call.1']
    #allocation5 [shape = 's32[2]{0}', space=sflag, size = 0x8, scoped, tag = 'scoped memory for tpu_custom_call.1']
    #allocation6 [shape = 'u8[8192]{0}', space=vmem, size = 0x2000, scoped, tag = 'output window, operand 0']
    %18 = vsyncpa [#allocation4], 0
    %19 = vsyncpa [#allocation5], 0
    %s20 = scalar_lea.sflag [#allocation5], 1
    %21 = vsyncpa %s20, 0
    loop: start=0, step=1, limit=4
    $region2: #{tpu_custom_call.1} parent=1 // loop_pre_header
      _
    $region3: #{tpu_custom_call.1} parent=1 // loop_header
      %s23 = sphi 0, %s27
      %p24 = scmp.ge.s32.totalorder %s23, 4
      %s33 = sphi 0, %s35
      %s36 = sphi 0, %s33
      %s37 = sphi 0, %s36
      %s53 = sphi 0, %s37
      %s57 = sphi 0, %s57
      %s59 = sphi 0, %s57
      %s60 = sphi 0, %s59
      %s74 = sphi 0, %s60
      %s78 = sphi 0, %s78
      %s80 = sphi 0, %s78
      %s81 = sphi 0, %s80
      %s95 = sphi 0, %s81
      %s99 = sphi 0, %s99
      %s101 = sphi 0, %s99
      %s102 = sphi 0, %s101
      %s116 = sphi 0, %s102
      %s120 = sphi 0, %s120
      %s122 = sphi 0, %s120
      %s123 = sphi 0, %s122
      %s137 = sphi 0, %s123
      %s141 = sphi 0, %s141
      %s143 = sphi 0, %s141
      %s144 = sphi 0, %s143
      %s158 = sphi 0, %s144
      %s162 = sphi 0, %s162
      %s164 = sphi 0, %s162
      %s165 = sphi 0, %s164
      %s179 = sphi 0, %s165
      %s183 = sphi 0, %s183
      %s185 = sphi 0, %s183
      %s186 = sphi 0, %s185
      %s200 = sphi 0, %s186
      %s204 = sphi 0, %s204
      %s206 = sphi 0, %s204
      %s207 = sphi 0, %s206
      %s221 = sphi 0, %s207
      %s225 = sphi 0, %s225
      %s227 = sphi 0, %s225
      %s228 = sphi 0, %s227
      %s242 = sphi 0, %s228
      %s246 = sphi 0, %s246
      %s248 = sphi 0, %s246
      %s249 = sphi 0, %s248
      %s263 = sphi 0, %s249
      %s269 = sphi 0, %s271
      %s272 = sphi 0, %s269
      %s273 = sphi 0, %s272
      %s289 = sphi 0, %s273
    $region4: #{tpu_custom_call.1} parent=1 // loop_header_branch
      %26 = sbr.rel (%p24) target = $region8
    $region5: #{tpu_custom_call.1} parent=1 // loop_body
      %s28 = ssub.s32 %s23, 1
      %s29 = ssub.s32 %s23, 2
      %s30 = sadd.s32 %s23, 1
      %s31 = ssub.s32 %s23, %s30
      %p32 = scmp.eq.s32.totalorder %s31, 0
      %s34 = sadd.s32 %s33, 1
      %s35 = scalar_select %p32, %s33, %s34
      %p38 = pneg %p32
      %p39 = scmp.eq.s32.totalorder %s23, 1
      %p40 = por %p38, %p39
      %p41 = scmp.ne.s32.totalorder %s33, %s36
      %p42 = scmp.eq.s32.totalorder %s23, 0
      %p43 = por %p41, %p42
      %p44 = scmp.ne.s32.totalorder %s33, %s36
      %p45 = scmp.eq.s32.totalorder %s28, 1
      %p46 = por %p44, %p45
      %p47 = scmp.ne.s32.totalorder %s36, %s37
      %p48 = scmp.eq.s32.totalorder %s28, 0
      %p49 = por %p47, %p48
      %p50 = scmp.ne.s32.totalorder %s36, %s37
      %p51 = scmp.eq.s32.totalorder %s29, 1
      %p52 = por %p50, %p51
      %p54 = scmp.ne.s32.totalorder %s37, %s53
      %p55 = scmp.eq.s32.totalorder %s29, 0
      %p56 = por %p54, %p55
      %s58 = sadd.s32 %s57, 1
      %p61 = scmp.eq.s32.totalorder %s23, 1
      %p62 = scmp.ne.s32.totalorder %s57, %s59
      %p63 = scmp.eq.s32.totalorder %s23, 0
      %p64 = por %p62, %p63
      %p65 = scmp.ne.s32.totalorder %s57, %s59
      %p66 = scmp.eq.s32.totalorder %s28, 1
      %p67 = por %p65, %p66
      %p68 = scmp.ne.s32.totalorder %s59, %s60
      %p69 = scmp.eq.s32.totalorder %s28, 0
      %p70 = por %p68, %p69
      %p71 = scmp.ne.s32.totalorder %s59, %s60
      %p72 = scmp.eq.s32.totalorder %s29, 1
      %p73 = por %p71, %p72
      %p75 = scmp.ne.s32.totalorder %s60, %s74
      %p76 = scmp.eq.s32.totalorder %s29, 0
      %p77 = por %p75, %p76
      %s79 = sadd.s32 %s78, 1
      %p82 = scmp.eq.s32.totalorder %s23, 1
      %p83 = scmp.ne.s32.totalorder %s78, %s80
      %p84 = scmp.eq.s32.totalorder %s23, 0
      %p85 = por %p83, %p84
      %p86 = scmp.ne.s32.totalorder %s78, %s80
      %p87 = scmp.eq.s32.totalorder %s28, 1
      %p88 = por %p86, %p87
      %p89 = scmp.ne.s32.totalorder %s80, %s81
      %p90 = scmp.eq.s32.totalorder %s28, 0
      %p91 = por %p89, %p90
      %p92 = scmp.ne.s32.totalorder %s80, %s81
      %p93 = scmp.eq.s32.totalorder %s29, 1
      %p94 = por %p92, %p93
      %p96 = scmp.ne.s32.totalorder %s81, %s95
      %p97 = scmp.eq.s32.totalorder %s29, 0
      %p98 = por %p96, %p97
      %s100 = sadd.s32 %s99, 1
      %p103 = scmp.eq.s32.totalorder %s23, 1
      %p104 = scmp.ne.s32.totalorder %s99, %s101
      %p105 = scmp.eq.s32.totalorder %s23, 0
      %p106 = por %p104, %p105
      %p107 = scmp.ne.s32.totalorder %s99, %s101
      %p108 = scmp.eq.s32.totalorder %s28, 1
      %p109 = por %p107, %p108
      %p110 = scmp.ne.s32.totalorder %s101, %s102
      %p111 = scmp.eq.s32.totalorder %s28, 0
      %p112 = por %p110, %p111
      %p113 = scmp.ne.s32.totalorder %s101, %s102
      %p114 = scmp.eq.s32.totalorder %s29, 1
      %p115 = por %p113, %p114
      %p117 = scmp.ne.s32.totalorder %s102, %s116
      %p118 = scmp.eq.s32.totalorder %s29, 0
      %p119 = por %p117, %p118
      %s121 = sadd.s32 %s120, 1
      %p124 = scmp.eq.s32.totalorder %s23, 1
      %p125 = scmp.ne.s32.totalorder %s120, %s122
      %p126 = scmp.eq.s32.totalorder %s23, 0
      %p127 = por %p125, %p126
      %p128 = scmp.ne.s32.totalorder %s120, %s122
      %p129 = scmp.eq.s32.totalorder %s28, 1
      %p130 = por %p128, %p129
      %p131 = scmp.ne.s32.totalorder %s122, %s123
      %p132 = scmp.eq.s32.totalorder %s28, 0
      %p133 = por %p131, %p132
      %p134 = scmp.ne.s32.totalorder %s122, %s123
      %p135 = scmp.eq.s32.totalorder %s29, 1
      %p136 = por %p134, %p135
      %p138 = scmp.ne.s32.totalorder %s123, %s137
      %p139 = scmp.eq.s32.totalorder %s29, 0
      %p140 = por %p138, %p139
      %s142 = sadd.s32 %s141, 1
      %p145 = scmp.eq.s32.totalorder %s23, 1
      %p146 = scmp.ne.s32.totalorder %s141, %s143
      %p147 = scmp.eq.s32.totalorder %s23, 0
      %p148 = por %p146, %p147
      %p149 = scmp.ne.s32.totalorder %s141, %s143
      %p150 = scmp.eq.s32.totalorder %s28, 1
      %p151 = por %p149, %p150
      %p152 = scmp.ne.s32.totalorder %s143, %s144
      %p153 = scmp.eq.s32.totalorder %s28, 0
      %p154 = por %p152, %p153
      %p155 = scmp.ne.s32.totalorder %s143, %s144
      %p156 = scmp.eq.s32.totalorder %s29, 1
      %p157 = por %p155, %p156
      %p159 = scmp.ne.s32.totalorder %s144, %s158
      %p160 = scmp.eq.s32.totalorder %s29, 0
      %p161 = por %p159, %p160
      %s163 = sadd.s32 %s162, 1
      %p166 = scmp.eq.s32.totalorder %s23, 1
      %p167 = scmp.ne.s32.totalorder %s162, %s164
      %p168 = scmp.eq.s32.totalorder %s23, 0
      %p169 = por %p167, %p168
      %p170 = scmp.ne.s32.totalorder %s162, %s164
      %p171 = scmp.eq.s32.totalorder %s28, 1
      %p172 = por %p170, %p171
      %p173 = scmp.ne.s32.totalorder %s164, %s165
      %p174 = scmp.eq.s32.totalorder %s28, 0
      %p175 = por %p173, %p174
      %p176 = scmp.ne.s32.totalorder %s164, %s165
      %p177 = scmp.eq.s32.totalorder %s29, 1
      %p178 = por %p176, %p177
      %p180 = scmp.ne.s32.totalorder %s165, %s179
      %p181 = scmp.eq.s32.totalorder %s29, 0
      %p182 = por %p180, %p181
      %s184 = sadd.s32 %s183, 1
      %p187 = scmp.eq.s32.totalorder %s23, 1
      %p188 = scmp.ne.s32.totalorder %s183, %s185
      %p189 = scmp.eq.s32.totalorder %s23, 0
      %p190 = por %p188, %p189
      %p191 = scmp.ne.s32.totalorder %s183, %s185
      %p192 = scmp.eq.s32.totalorder %s28, 1
      %p193 = por %p191, %p192
      %p194 = scmp.ne.s32.totalorder %s185, %s186
      %p195 = scmp.eq.s32.totalorder %s28, 0
      %p196 = por %p194, %p195
      %p197 = scmp.ne.s32.totalorder %s185, %s186
      %p198 = scmp.eq.s32.totalorder %s29, 1
      %p199 = por %p197, %p198
      %p201 = scmp.ne.s32.totalorder %s186, %s200
      %p202 = scmp.eq.s32.totalorder %s29, 0
      %p203 = por %p201, %p202
      %s205 = sadd.s32 %s204, 1
      %p208 = scmp.eq.s32.totalorder %s23, 1
      %p209 = scmp.ne.s32.totalorder %s204, %s206
      %p210 = scmp.eq.s32.totalorder %s23, 0
      %p211 = por %p209, %p210
      %p212 = scmp.ne.s32.totalorder %s204, %s206
      %p213 = scmp.eq.s32.totalorder %s28, 1
      %p214 = por %p212, %p213
      %p215 = scmp.ne.s32.totalorder %s206, %s207
      %p216 = scmp.eq.s32.totalorder %s28, 0
      %p217 = por %p215, %p216
      %p218 = scmp.ne.s32.totalorder %s206, %s207
      %p219 = scmp.eq.s32.totalorder %s29, 1
      %p220 = por %p218, %p219
      %p222 = scmp.ne.s32.totalorder %s207, %s221
      %p223 = scmp.eq.s32.totalorder %s29, 0
      %p224 = por %p222, %p223
      %s226 = sadd.s32 %s225, 1
      %p229 = scmp.eq.s32.totalorder %s23, 1
      %p230 = scmp.ne.s32.totalorder %s225, %s227
      %p231 = scmp.eq.s32.totalorder %s23, 0
      %p232 = por %p230, %p231
      %p233 = scmp.ne.s32.totalorder %s225, %s227
      %p234 = scmp.eq.s32.totalorder %s28, 1
      %p235 = por %p233, %p234
      %p236 = scmp.ne.s32.totalorder %s227, %s228
      %p237 = scmp.eq.s32.totalorder %s28, 0
      %p238 = por %p236, %p237
      %p239 = scmp.ne.s32.totalorder %s227, %s228
      %p240 = scmp.eq.s32.totalorder %s29, 1
      %p241 = por %p239, %p240
      %p243 = scmp.ne.s32.totalorder %s228, %s242
      %p244 = scmp.eq.s32.totalorder %s29, 0
      %p245 = por %p243, %p244
      %s247 = sadd.s32 %s246, 1
      %p250 = scmp.eq.s32.totalorder %s23, 1
      %p251 = scmp.ne.s32.totalorder %s246, %s248
      %p252 = scmp.eq.s32.totalorder %s23, 0
      %p253 = por %p251, %p252
      %p254 = scmp.ne.s32.totalorder %s246, %s248
      %p255 = scmp.eq.s32.totalorder %s28, 1
      %p256 = por %p254, %p255
      %p257 = scmp.ne.s32.totalorder %s248, %s249
      %p258 = scmp.eq.s32.totalorder %s28, 0
      %p259 = por %p257, %p258
      %p260 = scmp.ne.s32.totalorder %s248, %s249
      %p261 = scmp.eq.s32.totalorder %s29, 1
      %p262 = por %p260, %p261
      %p264 = scmp.ne.s32.totalorder %s249, %s263
      %p265 = scmp.eq.s32.totalorder %s29, 0
      %p266 = por %p264, %p265
      %s267 = ssub.s32 %s23, %s30
      %p268 = scmp.eq.s32.totalorder %s267, 0
      %s270 = sadd.s32 %s269, 1
      %s271 = scalar_select %p268, %s269, %s270
      %p274 = pneg %p268
      %p275 = scmp.eq.s32.totalorder %s23, 1
      %p276 = por %p274, %p275
      %p277 = scmp.ne.s32.totalorder %s269, %s272
      %p278 = scmp.eq.s32.totalorder %s23, 0
      %p279 = por %p277, %p278
      %p280 = scmp.ne.s32.totalorder %s269, %s272
      %p281 = scmp.eq.s32.totalorder %s28, 1
      %p282 = por %p280, %p281
      %p283 = scmp.ne.s32.totalorder %s272, %s273
      %p284 = scmp.eq.s32.totalorder %s28, 0
      %p285 = por %p283, %p284
      %p286 = scmp.ne.s32.totalorder %s272, %s273
      %p287 = scmp.eq.s32.totalorder %s29, 1
      %p288 = por %p286, %p287
      %p290 = scmp.ne.s32.totalorder %s273, %s289
      %p291 = scmp.eq.s32.totalorder %s29, 0
      %p292 = por %p290, %p291
      %p293 = scmp.le.s32.totalorder 1, %s23
      %p294 = scmp.lt.s32.totalorder %s23, 3
      %p295 = pnand %p293, %p294
      %p296 = pneg %p295
      // Predicated region
      $region9: #{tpu_custom_call.1} parent=5 // pred_check
        _
      $region10: #{tpu_custom_call.1} parent=5 // pred_check_branch
        %298 = sbr.rel (%p295) target = $region12
      $region11: #{tpu_custom_call.1} parent=5 // pred_region
        %s299 = ssub.s32 %s23, 1
        // Predicated region
        $region13: #{tpu_custom_call.1} parent=11 // pred_check
          %p300 = pneg %p70
        $region14: #{tpu_custom_call.1} parent=11 // pred_check_branch
          %302 = sbr.rel (%p300) target = $region16
        $region15: #{tpu_custom_call.1} parent=11 // pred_region
          _
        $region16: #{tpu_custom_call.1} parent=11 // pred_fallthru
          _
        // Predicated region
        $region17: #{tpu_custom_call.1} parent=11 // pred_check
          %p303 = pneg %p91
        $region18: #{tpu_custom_call.1} parent=11 // pred_check_branch
          %305 = sbr.rel (%p303) target = $region20
        $region19: #{tpu_custom_call.1} parent=11 // pred_region
          _
        $region20: #{tpu_custom_call.1} parent=11 // pred_fallthru
          _
        // Predicated region
        $region21: #{tpu_custom_call.1} parent=11 // pred_check
          %p306 = pneg %p112
        $region22: #{tpu_custom_call.1} parent=11 // pred_check_branch
          %308 = sbr.rel (%p306) target = $region24
        $region23: #{tpu_custom_call.1} parent=11 // pred_region
          %s310 = ssub.s32 256, 256
          %311 = vsyncadd [#allocation4], %s310
          %s312 = sshll.u32 [#allocation3], 4
          %s313 = int_to_ptr.vmem [resolvable:$true] %s312
          %318 = dma.hbm_to_vmem [thread:$0]  %s3, 256, %s313, [#allocation4], 64, 64, 4
        $region24: #{tpu_custom_call.1} parent=11 // pred_fallthru
          _
        // Predicated region
        $region25: #{tpu_custom_call.1} parent=11 // pred_check
          %p319 = pneg %p133
        $region26: #{tpu_custom_call.1} parent=11 // pred_check_branch
          %321 = sbr.rel (%p319) target = $region28
        $region27: #{tpu_custom_call.1} parent=11 // pred_region
          _
        $region28: #{tpu_custom_call.1} parent=11 // pred_fallthru
          _
        // Predicated region
        $region29: #{tpu_custom_call.1} parent=11 // pred_check
          %p322 = pneg %p154
        $region30: #{tpu_custom_call.1} parent=11 // pred_check_branch
          %324 = sbr.rel (%p322) target = $region32
        $region31: #{tpu_custom_call.1} parent=11 // pred_region
          _
        $region32: #{tpu_custom_call.1} parent=11 // pred_fallthru
          _
        // Predicated region
        $region33: #{tpu_custom_call.1} parent=11 // pred_check
          %p325 = pneg %p175
        $region34: #{tpu_custom_call.1} parent=11 // pred_check_branch
          %327 = sbr.rel (%p325) target = $region36
        $region35: #{tpu_custom_call.1} parent=11 // pred_region
          _
        $region36: #{tpu_custom_call.1} parent=11 // pred_fallthru
          _
        // Predicated region
        $region37: #{tpu_custom_call.1} parent=11 // pred_check
          %p328 = pneg %p196
        $region38: #{tpu_custom_call.1} parent=11 // pred_check_branch
          %330 = sbr.rel (%p328) target = $region40
        $region39: #{tpu_custom_call.1} parent=11 // pred_region
          _
        $region40: #{tpu_custom_call.1} parent=11 // pred_fallthru
          _
        // Predicated region
        $region41: #{tpu_custom_call.1} parent=11 // pred_check
          %p331 = pneg %p217
        $region42: #{tpu_custom_call.1} parent=11 // pred_check_branch
          %333 = sbr.rel (%p331) target = $region44
        $region43: #{tpu_custom_call.1} parent=11 // pred_region
          _
        $region44: #{tpu_custom_call.1} parent=11 // pred_fallthru
          _
        // Predicated region
        $region45: #{tpu_custom_call.1} parent=11 // pred_check
          %p334 = pneg %p238
        $region46: #{tpu_custom_call.1} parent=11 // pred_check_branch
          %336 = sbr.rel (%p334) target = $region48
        $region47: #{tpu_custom_call.1} parent=11 // pred_region
          _
        $region48: #{tpu_custom_call.1} parent=11 // pred_fallthru
          _
        // Predicated region
        $region49: #{tpu_custom_call.1} parent=11 // pred_check
          %p337 = pneg %p259
        $region50: #{tpu_custom_call.1} parent=11 // pred_check_branch
          %339 = sbr.rel (%p337) target = $region52
        $region51: #{tpu_custom_call.1} parent=11 // pred_region
          _
        $region52: #{tpu_custom_call.1} parent=11 // pred_fallthru
          _
      $region12: #{tpu_custom_call.1} parent=5 // pred_fallthru
        _
      %p340 = scmp.lt.s32.totalorder %s23, 2
      // Predicated region
      $region53: #{tpu_custom_call.1} parent=5 // pred_check
        %p341 = pneg %p340
      $region54: #{tpu_custom_call.1} parent=5 // pred_check_branch
        %343 = sbr.rel (%p341) target = $region56
      $region55: #{tpu_custom_call.1} parent=5 // pred_region
        // Predicated region
        $region57: #{tpu_custom_call.1} parent=55 // pred_check
          %p344 = pneg %p43
        $region58: #{tpu_custom_call.1} parent=55 // pred_check_branch
          %346 = sbr.rel (%p344) target = $region60
        $region59: #{tpu_custom_call.1} parent=55 // pred_region
          %p347 = scmp.lt.s32.totalorder %s23, 1
          %s348 = scalar_select %p347, %s23, 1
          %s349 = smul.addr %s348, 8
          %s350 = scalar_lea.vmem %s0, %s349
        $region60: #{tpu_custom_call.1} parent=55 // pred_fallthru
          _
      $region56: #{tpu_custom_call.1} parent=5 // pred_fallthru
        _
      %p351 = scmp.le.s32.totalorder 1, %s23
      %p352 = scmp.lt.s32.totalorder %s23, 3
      %p353 = pnand %p351, %p352
      %p354 = pneg %p353
      // Predicated region
      $region61: #{tpu_custom_call.1} parent=5 // pred_check
        _
      $region62: #{tpu_custom_call.1} parent=5 // pred_check_branch
        %356 = sbr.rel (%p353) target = $region64
      $region63: #{tpu_custom_call.1} parent=5 // pred_region
        %s357 = ssub.s32 %s23, 1
        // Predicated region
        $region65: #{tpu_custom_call.1} parent=63 // pred_check
          %p358 = pneg %p112
        $region66: #{tpu_custom_call.1} parent=63 // pred_check_branch
          %360 = sbr.rel (%p358) target = $region68
        $region67: #{tpu_custom_call.1} parent=63 // pred_region
          %361 = dma.done [#allocation4], 256
        $region68: #{tpu_custom_call.1} parent=63 // pred_fallthru
          _
        %p362 = scmp.lt.s32.totalorder %s28, 1
        %s363 = scalar_select %p362, %s28, 1
        %s364 = smul.addr %s363, 8
        %s365 = scalar_lea.vmem %s0, %s364
        %p366 = pneg %p49
        %p367 = pneg %p46
        %p368 = pneg %p70
        %p369 = pneg %p67
        %p370 = pneg %p91
        %p371 = pneg %p88
        %p372 = pneg %p112
        %p373 = pneg %p109
        %p374 = pneg %p133
        %p375 = pneg %p130
        %p376 = pneg %p154
        %p377 = pneg %p151
        %p378 = pneg %p175
        %p379 = pneg %p172
        %p380 = pneg %p196
        %p381 = pneg %p193
        %p382 = pneg %p217
        %p383 = pneg %p214
        %p384 = pneg %p238
        %p385 = pneg %p235
        %p386 = pneg %p259
        %p387 = pneg %p256
        %p388 = pneg %p285
        %p389 = pneg %p282
        %s390 = sand.u32 %s272, 1
        %s391 = scalar_lea.sflag [#allocation5], %s390
        %s392 = sand.u32 %s272, 1
        %s393 = smul.addr %s392, 8
        %s394 = scalar_lea.vmem [#allocation6], %s393
        %p395 = scmp.lt.s32.totalorder %s28, 1
        %s396 = scalar_select %p395, %s28, 1
        %s397 = smul.addr %s396, 8
        %s398 = scalar_lea.vmem %s0, %s397
        %v400 = vld [vmem:[%s398] sm:$0xff]
        %v401 = vpack.c.bf16 %v400, %v400
        %v402 = vld [vmem:[%s1] sm:$0xff]
        %v403 = vld [vmem:[%s1 + $0x8] sm:$0xff]
        %v404 = vld [vmem:[%s1 + $0x10] sm:$0xff]
        %v405 = vld [vmem:[%s1 + $0x18] sm:$0xff]
        %v406 = vld [vmem:[%s2] sm:$0x3]
        %v408 = vlaneseq
        %v409 = vshrl.u32 %v408, 7
        %v410 = vsub.s32 0, %v409
        %v411 = vrot.slane %v406, %v410
        %v417 = vunpack.c.l.b16 %v402
        %v418 = vunpack.c.h.b16 %v402
        %v419 = vunpack.c.l.b16 %v403
        %v420 = vunpack.c.h.b16 %v403
        %v421 = vunpack.c.l.b16 %v404
        %v422 = vunpack.c.h.b16 %v404
        %v423 = vunpack.c.l.b16 %v405
        %v424 = vunpack.c.h.b16 %v405
        %v425 = vpack.c.b16 %v419, %v417
        %v426 = vpack.c.b16 %v420, %v418
        %v427 = vpack.c.b16 %v423, %v421
        %v428 = vpack.c.b16 %v424, %v422
        %vm433 = vcmask 261120
        %v435 = vsel %vm433, %v401, 0
        %437 = vmatprep.subr.bf16.mxu0 %v426
        %438 = vmatpush1.bf16.msra.mxu0 %v425
        %439 = vmatprep.subr.bf16.mxu0 %v428
        %440 = vmatpush1.bf16.msra.mxu0 %v427
        %441 = vmatprep.subr.bf16.mxu0 0
        %442 = vmatpush1.bf16.msra.mxu0 0
        %443 = vmatprep.subr.bf16.mxu0 0
        %444 = vmatpush1.bf16.msra.mxu0 0
        %445 = vmatprep.subr.bf16.mxu0 0
        %446 = vmatpush1.bf16.msra.mxu0 0
        %447 = vmatprep.subr.bf16.mxu0 0
        %448 = vmatpush1.bf16.msra.mxu0 0
        %449 = vmatprep.subr.bf16.mxu0 0
        %450 = vmatpush1.bf16.msra.mxu0 0
        %451 = vmatprep.subr.bf16.mxu0 0
        %452 = vmatpush1.bf16.msra.mxu0 0
        %453 = vmatprep.subr.bf16.mxu0 0
        %454 = vmatpush1.bf16.msra.mxu0 0
        %455 = vmatprep.subr.bf16.mxu0 0
        %456 = vmatpush1.bf16.msra.mxu0 0
        %457 = vmatprep.subr.bf16.mxu0 0
        %458 = vmatpush1.bf16.msra.mxu0 0
        %459 = vmatprep.subr.bf16.mxu0 0
        %460 = vmatpush1.bf16.msra.mxu0 0
        %461 = vmatprep.subr.bf16.mxu0 0
        %462 = vmatpush1.bf16.msra.mxu0 0
        %463 = vmatprep.subr.bf16.mxu0 0
        %464 = vmatpush1.bf16.msra.mxu0 0
        %465 = vmatprep.subr.bf16.mxu0 0
        %466 = vmatpush1.bf16.msra.mxu0 0
        %467 = vmatprep.subr.bf16.mxu0 0
        %468 = vmatpush1.bf16.msra.mxu0 0
        %469 = vmatprep.mubr.bf16.mxu0 0
        %470 = vmatmul.mubr.bf16.gmra.mrb[0].mxu0 %v435
        %v471 = vpop.f32.mrb[0].mxu0
        %v472 = vadd.f32 %v411, %v471
        %v473 = vpop.f32.mrb[0].mxu0
        %v474 = vpop.f32.mrb[0].mxu0
        %v475 = vpop.f32.mrb[0].mxu0
        %476 = vdwg.mxu0
        %v477 = vmax.f32 %v472, 0.0
        %v478 = vpack.c.bf16 %v477, %v477
        %v479 = vld [vmem:[#allocation3] sm:$0xf]
        %v480 = vld [vmem:[#allocation3 + $0x4] sm:$0xf]
        %v481 = vld [vmem:[#allocation3 + $0x8] sm:$0xf]
        %v482 = vld [vmem:[#allocation3 + $0xc] sm:$0xf]
        %v483 = vld [vmem:[%s4] sm:$0x1]
        %v485 = vlaneseq
        %v486 = vshrl.u32 %v485, 7
        %v487 = vsub.s32 0, %v486
        %v488 = vrot.slane %v483, %v487
        %491 = vrot.lane.b32.xlu0 %v478, 96
        %v492 = vpop.permute.xlu0 %491
        %v497 = vunpack.c.l.b16 %v479
        %v498 = vunpack.c.l.b16 %v480
        %v499 = vunpack.c.l.b16 %v481
        %v500 = vunpack.c.l.b16 %v482
        %v501 = vpack.c.b16 %v498, %v497
        %v502 = vpack.c.b16 %v500, %v499
        %v506 = vsel %vm433, %v492, 0
        %508 = vmatprep.subr.bf16.mxu0 0
        %509 = vmatpush1.bf16.msra.mxu0 %v501
        %510 = vmatprep.subr.bf16.mxu0 0
        %511 = vmatpush1.bf16.msra.mxu0 %v502
        %512 = vmatprep.subr.bf16.mxu0 0
        %513 = vmatpush1.bf16.msra.mxu0 0
        %514 = vmatprep.subr.bf16.mxu0 0
        %515 = vmatpush1.bf16.msra.mxu0 0
        %516 = vmatprep.subr.bf16.mxu0 0
        %517 = vmatpush1.bf16.msra.mxu0 0
        %518 = vmatprep.subr.bf16.mxu0 0
        %519 = vmatpush1.bf16.msra.mxu0 0
        %520 = vmatprep.subr.bf16.mxu0 0
        %521 = vmatpush1.bf16.msra.mxu0 0
        %522 = vmatprep.subr.bf16.mxu0 0
        %523 = vmatpush1.bf16.msra.mxu0 0
        %524 = vmatprep.subr.bf16.mxu0 0
        %525 = vmatpush1.bf16.msra.mxu0 0
        %526 = vmatprep.subr.bf16.mxu0 0
        %527 = vmatpush1.bf16.msra.mxu0 0
        %528 = vmatprep.subr.bf16.mxu0 0
        %529 = vmatpush1.bf16.msra.mxu0 0
        %530 = vmatprep.subr.bf16.mxu0 0
        %531 = vmatpush1.bf16.msra.mxu0 0
        %532 = vmatprep.subr.bf16.mxu0 0
        %533 = vmatpush1.bf16.msra.mxu0 0
        %534 = vmatprep.subr.bf16.mxu0 0
        %535 = vmatpush1.bf16.msra.mxu0 0
        %536 = vmatprep.subr.bf16.mxu0 0
        %537 = vmatpush1.bf16.msra.mxu0 0
        %538 = vmatprep.subr.bf16.mxu0 0
        %539 = vmatpush1.bf16.msra.mxu0 0
        %540 = vmatprep.mubr.bf16.mxu0 0
        %541 = vmatmul.mubr.bf16.gmra.mrb[0].mxu0 %v506
        %v542 = vpop.f32.mrb[0].mxu0
        %v543 = vadd.f32 %v488, %v542
        %v544 = vpop.f32.mrb[0].mxu0
        %v545 = vpop.f32.mrb[0].mxu0
        %v546 = vpop.f32.mrb[0].mxu0
        %547 = vdwg.mxu0
        %v548 = vmax.f32 %v543, 0.0
        %v549 = vld [vmem:[%s5] sm:$0xf]
        %v550 = vld [vmem:[%s5 + $0x4] sm:$0xf]
        %v551 = vld [vmem:[%s5 + $0x8] sm:$0xf]
        %v552 = vld [vmem:[%s5 + $0xc] sm:$0xf]
        %v553 = vld [vmem:[%s6] sm:$0x1]
        %v555 = vlaneseq
        %v556 = vshrl.u32 %v555, 7
        %v557 = vsub.s32 0, %v556
        %v558 = vrot.slane %v553, %v557
        %v564 = vunpack.c.l.b16 %v549
        %v565 = vunpack.c.l.b16 %v550
        %v566 = vunpack.c.l.b16 %v551
        %v567 = vunpack.c.l.b16 %v552
        %v568 = vpack.c.b16 %v565, %v564
        %v569 = vpack.c.b16 %v567, %v566
        %v573 = vsel %vm433, %v478, 0
        %575 = vmatprep.subr.bf16.mxu0 0
        %576 = vmatpush1.bf16.msra.mxu0 %v568
        %577 = vmatprep.subr.bf16.mxu0 0
        %578 = vmatpush1.bf16.msra.mxu0 %v569
        %579 = vmatprep.subr.bf16.mxu0 0
        %580 = vmatpush1.bf16.msra.mxu0 0
        %581 = vmatprep.subr.bf16.mxu0 0
        %582 = vmatpush1.bf16.msra.mxu0 0
        %583 = vmatprep.subr.bf16.mxu0 0
        %584 = vmatpush1.bf16.msra.mxu0 0
        %585 = vmatprep.subr.bf16.mxu0 0
        %586 = vmatpush1.bf16.msra.mxu0 0
        %587 = vmatprep.subr.bf16.mxu0 0
        %588 = vmatpush1.bf16.msra.mxu0 0
        %589 = vmatprep.subr.bf16.mxu0 0
        %590 = vmatpush1.bf16.msra.mxu0 0
        %591 = vmatprep.subr.bf16.mxu0 0
        %592 = vmatpush1.bf16.msra.mxu0 0
        %593 = vmatprep.subr.bf16.mxu0 0
        %594 = vmatpush1.bf16.msra.mxu0 0
        %595 = vmatprep.subr.bf16.mxu0 0
        %596 = vmatpush1.bf16.msra.mxu0 0
        %597 = vmatprep.subr.bf16.mxu0 0
        %598 = vmatpush1.bf16.msra.mxu0 0
        %599 = vmatprep.subr.bf16.mxu0 0
        %600 = vmatpush1.bf16.msra.mxu0 0
        %601 = vmatprep.subr.bf16.mxu0 0
        %602 = vmatpush1.bf16.msra.mxu0 0
        %603 = vmatprep.subr.bf16.mxu0 0
        %604 = vmatpush1.bf16.msra.mxu0 0
        %605 = vmatprep.subr.bf16.mxu0 0
        %606 = vmatpush1.bf16.msra.mxu0 0
        %607 = vmatprep.mubr.bf16.mxu0 0
        %608 = vmatmul.mubr.bf16.gmra.mrb[0].mxu0 %v573
        %v609 = vpop.f32.mrb[0].mxu0
        %v610 = vadd.f32 %v558, %v609
        %v611 = vpop.f32.mrb[0].mxu0
        %v612 = vpop.f32.mrb[0].mxu0
        %v613 = vpop.f32.mrb[0].mxu0
        %614 = vdwg.mxu0
        %v615 = vpack.c.bf16 %v548, %v548
        %v616 = vld [vmem:[%s7] sm:$0xf]
        %v617 = vld [vmem:[%s7 + $0x4] sm:$0xf]
        %v618 = vld [vmem:[%s7 + $0x8] sm:$0xf]
        %v619 = vld [vmem:[%s7 + $0xc] sm:$0xf]
        %v620 = vld [vmem:[%s8] sm:$0x1]
        %v622 = vlaneseq
        %v623 = vshrl.u32 %v622, 7
        %v624 = vsub.s32 0, %v623
        %v625 = vrot.slane %v620, %v624
        %v631 = vunpack.c.l.b16 %v616
        %v632 = vunpack.c.l.b16 %v617
        %v633 = vunpack.c.l.b16 %v618
        %v634 = vunpack.c.l.b16 %v619
        %v635 = vpack.c.b16 %v632, %v631
        %v636 = vpack.c.b16 %v634, %v633
        %v640 = vsel %vm433, %v615, 0
        %642 = vmatprep.subr.bf16.mxu0 0
        %643 = vmatpush1.bf16.msra.mxu0 %v635
        %644 = vmatprep.subr.bf16.mxu0 0
        %645 = vmatpush1.bf16.msra.mxu0 %v636
        %646 = vmatprep.subr.bf16.mxu0 0
        %647 = vmatpush1.bf16.msra.mxu0 0
        %648 = vmatprep.subr.bf16.mxu0 0
        %649 = vmatpush1.bf16.msra.mxu0 0
        %650 = vmatprep.subr.bf16.mxu0 0
        %651 = vmatpush1.bf16.msra.mxu0 0
        %652 = vmatprep.subr.bf16.mxu0 0
        %653 = vmatpush1.bf16.msra.mxu0 0
        %654 = vmatprep.subr.bf16.mxu0 0
        %655 = vmatpush1.bf16.msra.mxu0 0
        %656 = vmatprep.subr.bf16.mxu0 0
        %657 = vmatpush1.bf16.msra.mxu0 0
        %658 = vmatprep.subr.bf16.mxu0 0
        %659 = vmatpush1.bf16.msra.mxu0 0
        %660 = vmatprep.subr.bf16.mxu0 0
        %661 = vmatpush1.bf16.msra.mxu0 0
        %662 = vmatprep.subr.bf16.mxu0 0
        %663 = vmatpush1.bf16.msra.mxu0 0
        %664 = vmatprep.subr.bf16.mxu0 0
        %665 = vmatpush1.bf16.msra.mxu0 0
        %666 = vmatprep.subr.bf16.mxu0 0
        %667 = vmatpush1.bf16.msra.mxu0 0
        %668 = vmatprep.subr.bf16.mxu0 0
        %669 = vmatpush1.bf16.msra.mxu0 0
        %670 = vmatprep.subr.bf16.mxu0 0
        %671 = vmatpush1.bf16.msra.mxu0 0
        %672 = vmatprep.subr.bf16.mxu0 0
        %673 = vmatpush1.bf16.msra.mxu0 0
        %674 = vmatprep.mubr.bf16.mxu0 0
        %675 = vmatmul.mubr.bf16.gmra.mrb[0].mxu0 %v640
        %v676 = vpop.f32.mrb[0].mxu0
        %v677 = vadd.f32 %v625, %v676
        %v678 = vpop.f32.mrb[0].mxu0
        %v679 = vpop.f32.mrb[0].mxu0
        %v680 = vpop.f32.mrb[0].mxu0
        %681 = vdwg.mxu0
        %v682 = vld [vmem:[%s9] sm:$0xf]
        %v683 = vld [vmem:[%s9 + $0x4] sm:$0xf]
        %v684 = vld [vmem:[#allocation2] sm:$0x1]
        %v686 = vlaneseq
        %v687 = vshrl.u32 %v686, 7
        %v688 = vsub.s32 0, %v687
        %v689 = vrot.slane %v684, %v688
        %691 = vrot.lane.b32.xlu0 %v478, 64
        %v692 = vpop.permute.xlu0 %691
        %v695 = vunpack.c.l.b16 %v682
        %v696 = vunpack.c.l.b16 %v683
        %v697 = vpack.c.b16 %v696, %v695
        %vm699 = vcmask 130048
        %v701 = vsel %vm699, %v692, 0
        %703 = vmatprep.subr.bf16.mxu0 0
        %704 = vmatpush1.bf16.msra.mxu0 %v697
        %705 = vmatprep.subr.bf16.mxu0 0
        %706 = vmatpush1.bf16.msra.mxu0 0
        %707 = vmatprep.subr.bf16.mxu0 0
        %708 = vmatpush1.bf16.msra.mxu0 0
        %709 = vmatprep.subr.bf16.mxu0 0
        %710 = vmatpush1.bf16.msra.mxu0 0
        %711 = vmatprep.subr.bf16.mxu0 0
        %712 = vmatpush1.bf16.msra.mxu0 0
        %713 = vmatprep.subr.bf16.mxu0 0
        %714 = vmatpush1.bf16.msra.mxu0 0
        %715 = vmatprep.subr.bf16.mxu0 0
        %716 = vmatpush1.bf16.msra.mxu0 0
        %717 = vmatprep.subr.bf16.mxu0 0
        %718 = vmatpush1.bf16.msra.mxu0 0
        %719 = vmatprep.subr.bf16.mxu0 0
        %720 = vmatpush1.bf16.msra.mxu0 0
        %721 = vmatprep.subr.bf16.mxu0 0
        %722 = vmatpush1.bf16.msra.mxu0 0
        %723 = vmatprep.subr.bf16.mxu0 0
        %724 = vmatpush1.bf16.msra.mxu0 0
        %725 = vmatprep.subr.bf16.mxu0 0
        %726 = vmatpush1.bf16.msra.mxu0 0
        %727 = vmatprep.subr.bf16.mxu0 0
        %728 = vmatpush1.bf16.msra.mxu0 0
        %729 = vmatprep.subr.bf16.mxu0 0
        %730 = vmatpush1.bf16.msra.mxu0 0
        %731 = vmatprep.subr.bf16.mxu0 0
        %732 = vmatpush1.bf16.msra.mxu0 0
        %733 = vmatprep.subr.bf16.mxu0 0
        %734 = vmatpush1.bf16.msra.mxu0 0
        %735 = vmatprep.mubr.bf16.mxu0 0
        %736 = vmatmul.mubr.bf16.gmra.mrb[0].mxu0 %v701
        %v737 = vpop.f32.mrb[0].mxu0
        %v738 = vadd.f32 %v689, %v737
        %v739 = vpop.f32.mrb[0].mxu0
        %v740 = vpop.f32.mrb[0].mxu0
        %v741 = vpop.f32.mrb[0].mxu0
        %742 = vdwg.mxu0
        %v743 = vxor.u32 %v677, 2147483648
        %v744 = vmul.f32 %v743, 1.442695
        %v745 = vpow.pop %v744
        %v746 = vadd.f32 %v745, 1.0
        %v747 = vrcp.pop %v746
        %v748 = vmul.f32 1.0, %v747
        %v749 = vmul.f32 %v748, 0.5
        %751 = vrot.lane.b32.xlu0 %v749, 126
        %v752 = vpop.permute.xlu0 %751
        %v754 = vsub.f32 %v748, %v752
        %v755 = vmax.f32 %v754, 0.0
        %v756 = vmin.f32 %v755, 1.0
        %v757 = vadd.f32 %v748, %v752
        %v758 = vmax.f32 %v757, 0.0
        %v759 = vmin.f32 %v758, 1.0
        %v760 = vadd.f32 %v756, 0.01
        %v761 = vmax.f32 %v759, %v760
        %763 = vrot.lane.b32.xlu0 %v756, 4
        %v764 = vpop.permute.xlu0 %763
        %767 = vrot.lane.b32.xlu0 %v761, 6
        %v768 = vpop.permute.xlu0 %767
        %771 = vrot.lane.b32.xlu0 %v738, 8
        %v772 = vpop.permute.xlu0 %771
        %775 = vrot.lane.b32.xlu0 %v472, 57
        %v776 = vpop.permute.xlu0 %775
        %vm778 = vcmask 31744
        %v779 = vsel %vm778, %v610, %v764
        %vm780 = vcmask 48128
        %v781 = vsel %vm780, %v779, %v768
        %vm782 = vcmask 64512
        %v783 = vsel %vm782, %v781, %v772
        %vm784 = vcmask 72704
        %v785 = vsel %vm784, %v783, %v776
        %vm786 = vcmask 80896
        %v787 = vsel %vm786, %v785, 0.0
        %788 = vst [vmem:[%s394] sm:$0xff] %v787
        %s789 = sand.u32 %s272, 1
        %s790 = scalar_lea.sflag [#allocation5], %s789
        %s791 = sand.u32 %s272, 1
        %s792 = smul.addr %s791, 8
        %s793 = scalar_lea.vmem [#allocation6], %s792
        // Predicated region
        $region69: #{tpu_custom_call.1} parent=63 // pred_check
          %p794 = pneg %p282
        $region70: #{tpu_custom_call.1} parent=63 // pred_check_branch
          %796 = sbr.rel (%p794) target = $region72
        $region71: #{tpu_custom_call.1} parent=63 // pred_region
          %s798 = ssub.s32 128, 128
          %799 = vsyncadd %s790, %s798
          %s800 = smul.addr %s28, 128
          %s801 = scalar_lea.hbm %s11, %s800
          %s803 = sshll.u32 %s793, 4
          %s804 = int_to_ptr.vmem [resolvable:$true] %s803
          %806 = dma.vmem_to_hbm [thread:$0]  %s804, 128, %s801, %s790
        $region72: #{tpu_custom_call.1} parent=63 // pred_fallthru
          _
      $region64: #{tpu_custom_call.1} parent=5 // pred_fallthru
        _
      %p807 = scmp.le.s32.totalorder 2, %s23
      // Predicated region
      $region73: #{tpu_custom_call.1} parent=5 // pred_check
        %p808 = pneg %p807
      $region74: #{tpu_custom_call.1} parent=5 // pred_check_branch
        %810 = sbr.rel (%p808) target = $region76
      $region75: #{tpu_custom_call.1} parent=5 // pred_region
        %s811 = ssub.s32 %s23, 2
        // Predicated region
        $region77: #{tpu_custom_call.1} parent=75 // pred_check
          %p812 = pneg %p288
        $region78: #{tpu_custom_call.1} parent=75 // pred_check_branch
          %814 = sbr.rel (%p812) target = $region80
        $region79: #{tpu_custom_call.1} parent=75 // pred_region
          %s815 = sand.u32 %s273, 1
          %s816 = scalar_lea.sflag [#allocation5], %s815
          %s817 = sand.u32 %s273, 1
          %s818 = smul.addr %s817, 8
          %s819 = scalar_lea.vmem [#allocation6], %s818
          %820 = dma.done %s816, 128
        $region80: #{tpu_custom_call.1} parent=75 // pred_fallthru
          _
      $region76: #{tpu_custom_call.1} parent=5 // pred_fallthru
        _
    $region6: #{tpu_custom_call.1} parent=1 // loop_footer
      %s27 = sadd.s32 1, %s23
    $region7: #{tpu_custom_call.1} parent=1 // loop_footer_branch
      %22 = sbr.rel target = $region3
    $region8: #{tpu_custom_call.1} parent=1 // loop_exit
      _
    %821 = vsyncpa [#allocation4], 1
    %s822 = scalar_lea.sflag [#allocation4], 1
    %823 = vsyncpa %s822, 1
    %824 = vsyncpa [#allocation5], 1
    %s825 = scalar_lea.sflag [#allocation5], 1
    %826 = vsyncpa %s825, 1

// kernel: tpu_custom_call.1
$region0: #{tpu_custom_call.1}
  #allocation0 [shape = 'u32[]', space=smem, size = 0x4, offset = 0x4, fixed_abs, tag = 'smem constant byte address 0x4 - core index']
  #allocation1 [shape = 'u32[144,128]{1,0:T(1,128)}', space=vmem, size = 0x12000, scoped, tag = 'internal scratch']
  #allocation2 [shape = 'f32[1,1]{1,0:T(1,128)S(1)}', space=vmem, size = 0x200, scoped, tag = 'scoped memory for tpu_custom_call.1']
  %s0 = inlined_call_operand.vmem [shape: f32[16,32], index: 0, kind: input, shape index: {}]
  %s1 = inlined_call_operand.vmem [shape: bf16[32,256], index: 1, kind: input, shape index: {}]
  %s2 = inlined_call_operand.vmem [shape: f32[1,256], index: 2, kind: input, shape index: {}]
  %s3 = inlined_call_operand.hbm [shape: bf16[32,32], index: 3, kind: input, shape index: {}]
  %s4 = inlined_call_operand.vmem [shape: f32[1,32], index: 4, kind: input, shape index: {}]
  %s5 = inlined_call_operand.vmem [shape: bf16[32,4], index: 5, kind: input, shape index: {}]
  %s6 = inlined_call_operand.vmem [shape: f32[1,4], index: 6, kind: input, shape index: {}]
  %s7 = inlined_call_operand.vmem [shape: bf16[32,4], index: 7, kind: input, shape index: {}]
  %s8 = inlined_call_operand.vmem [shape: f32[1,4], index: 8, kind: input, shape index: {}]
  %s9 = inlined_call_operand.vmem [shape: bf16[16,1], index: 9, kind: input, shape index: {}]
  %s10 = inlined_call_operand.<no memory space> [shape: f32[1,1], index: 10, kind: input, shape index: {}]
  %s11 = inlined_call_operand.hbm [shape: f32[16,128], index: 11, kind: output, shape index: {}]
  %s12 = sld [smem:[#allocation0]]
  $region81: #{tpu_custom_call.1} parent=0
    _
  %s14 = ssub.s32 1, %s12
  %s15 = scalar_select 0, %s14, %s12
  %v16 = vstv %s10
  %17 = vst [vmem:[#allocation2] sm:$0x1] %v16
  $region1: #{tpu_custom_call.1} parent=0
    #allocation3 [shape = 'u8[8192]{0}', space=vmem, size = 0x2000, scoped, tag = 'input window, operand 3, single buffered']
    #allocation4 [shape = 's32[2]{0}', space=sflag, size = 0x8, scoped, tag = 'scoped memory for tpu_custom_call.1']
    #allocation5 [shape = 's32[2]{0}', space=sflag, size = 0x8, scoped, tag = 'scoped memory for tpu_custom_call.1']
    #allocation6 [shape = 'u8[8192]{0}', space=vmem, size = 0x2000, scoped, tag = 'output window, operand 0']
    %18 = vsyncpa [#allocation4], 0
    %19 = vsyncpa [#allocation5], 0
    %s20 = scalar_lea.sflag [#allocation5], 1
    %21 = vsyncpa %s20, 0
    loop: start=0, step=1, limit=4
    $region2: #{tpu_custom_call.1} parent=1 // loop_pre_header
      _
    $region3: #{tpu_custom_call.1} parent=1 // loop_header
      %s23 = sphi 0, %s27
      %p24 = scmp.ge.s32.totalorder %s23, 4
      %s33 = sphi 0, %s35
      %s36 = sphi 0, %s33
      %s37 = sphi 0, %s36
      %s53 = sphi 0, %s37
      %s57 = sphi 0, %s57
      %s59 = sphi 0, %s57
      %s60 = sphi 0, %s59
      %s74 = sphi 0, %s60
      %s78 = sphi 0, %s78
      %s80 = sphi 0, %s78
      %s81 = sphi 0, %s80
      %s95 = sphi 0, %s81
      %s99 = sphi 0, %s99
      %s101 = sphi 0, %s99
      %s102 = sphi 0, %s101
      %s116 = sphi 0, %s102
      %s120 = sphi 0, %s120
      %s122 = sphi 0, %s120
      %s123 = sphi 0, %s122
      %s137 = sphi 0, %s123
      %s141 = sphi 0, %s141
      %s143 = sphi 0, %s141
      %s144 = sphi 0, %s143
      %s158 = sphi 0, %s144
      %s162 = sphi 0, %s162
      %s164 = sphi 0, %s162
      %s165 = sphi 0, %s164
      %s179 = sphi 0, %s165
      %s183 = sphi 0, %s183
      %s185 = sphi 0, %s183
      %s186 = sphi 0, %s185
      %s200 = sphi 0, %s186
      %s204 = sphi 0, %s204
      %s206 = sphi 0, %s204
      %s207 = sphi 0, %s206
      %s221 = sphi 0, %s207
      %s225 = sphi 0, %s225
      %s227 = sphi 0, %s225
      %s228 = sphi 0, %s227
      %s242 = sphi 0, %s228
      %s246 = sphi 0, %s246
      %s248 = sphi 0, %s246
      %s249 = sphi 0, %s248
      %s263 = sphi 0, %s249
      %s269 = sphi 0, %s271
      %s272 = sphi 0, %s269
      %s273 = sphi 0, %s272
      %s289 = sphi 0, %s273
    $region4: #{tpu_custom_call.1} parent=1 // loop_header_branch
      %26 = sbr.rel (%p24) target = $region8
    $region5: #{tpu_custom_call.1} parent=1 // loop_body
      %s28 = ssub.s32 %s23, 1
      %s29 = ssub.s32 %s23, 2
      %s30 = sadd.s32 %s23, 1
      %s31 = ssub.s32 %s23, %s30
      %p32 = scmp.eq.s32.totalorder %s31, 0
      %s34 = sadd.s32 %s33, 1
      %s35 = scalar_select %p32, %s33, %s34
      %p38 = pneg %p32
      %p39 = scmp.eq.s32.totalorder %s23, 1
      %p40 = por %p38, %p39
      %p41 = scmp.ne.s32.totalorder %s33, %s36
      %p42 = scmp.eq.s32.totalorder %s23, 0
      %p43 = por %p41, %p42
      %p44 = scmp.ne.s32.totalorder %s33, %s36
      %p45 = scmp.eq.s32.totalorder %s28, 1
      %p46 = por %p44, %p45
      %p47 = scmp.ne.s32.totalorder %s36, %s37
      %p48 = scmp.eq.s32.totalorder %s28, 0
      %p49 = por %p47, %p48
      %p50 = scmp.ne.s32.totalorder %s36, %s37
      %p51 = scmp.eq.s32.totalorder %s29, 1
      %p52 = por %p50, %p51
      %p54 = scmp.ne.s32.totalorder %s37, %s53
      %p55 = scmp.eq.s32.totalorder %s29, 0
      %p56 = por %p54, %p55
      %s58 = sadd.s32 %s57, 1
      %p61 = scmp.eq.s32.totalorder %s23, 1
      %p62 = scmp.ne.s32.totalorder %s57, %s59
      %p63 = scmp.eq.s32.totalorder %s23, 0
      %p64 = por %p62, %p63
      %p65 = scmp.ne.s32.totalorder %s57, %s59
      %p66 = scmp.eq.s32.totalorder %s28, 1
      %p67 = por %p65, %p66
      %p68 = scmp.ne.s32.totalorder %s59, %s60
      %p69 = scmp.eq.s32.totalorder %s28, 0
      %p70 = por %p68, %p69
      %p71 = scmp.ne.s32.totalorder %s59, %s60
      %p72 = scmp.eq.s32.totalorder %s29, 1
      %p73 = por %p71, %p72
      %p75 = scmp.ne.s32.totalorder %s60, %s74
      %p76 = scmp.eq.s32.totalorder %s29, 0
      %p77 = por %p75, %p76
      %s79 = sadd.s32 %s78, 1
      %p82 = scmp.eq.s32.totalorder %s23, 1
      %p83 = scmp.ne.s32.totalorder %s78, %s80
      %p84 = scmp.eq.s32.totalorder %s23, 0
      %p85 = por %p83, %p84
      %p86 = scmp.ne.s32.totalorder %s78, %s80
      %p87 = scmp.eq.s32.totalorder %s28, 1
      %p88 = por %p86, %p87
      %p89 = scmp.ne.s32.totalorder %s80, %s81
      %p90 = scmp.eq.s32.totalorder %s28, 0
      %p91 = por %p89, %p90
      %p92 = scmp.ne.s32.totalorder %s80, %s81
      %p93 = scmp.eq.s32.totalorder %s29, 1
      %p94 = por %p92, %p93
      %p96 = scmp.ne.s32.totalorder %s81, %s95
      %p97 = scmp.eq.s32.totalorder %s29, 0
      %p98 = por %p96, %p97
      %s100 = sadd.s32 %s99, 1
      %p103 = scmp.eq.s32.totalorder %s23, 1
      %p104 = scmp.ne.s32.totalorder %s99, %s101
      %p105 = scmp.eq.s32.totalorder %s23, 0
      %p106 = por %p104, %p105
      %p107 = scmp.ne.s32.totalorder %s99, %s101
      %p108 = scmp.eq.s32.totalorder %s28, 1
      %p109 = por %p107, %p108
      %p110 = scmp.ne.s32.totalorder %s101, %s102
      %p111 = scmp.eq.s32.totalorder %s28, 0
      %p112 = por %p110, %p111
      %p113 = scmp.ne.s32.totalorder %s101, %s102
      %p114 = scmp.eq.s32.totalorder %s29, 1
      %p115 = por %p113, %p114
      %p117 = scmp.ne.s32.totalorder %s102, %s116
      %p118 = scmp.eq.s32.totalorder %s29, 0
      %p119 = por %p117, %p118
      %s121 = sadd.s32 %s120, 1
      %p124 = scmp.eq.s32.totalorder %s23, 1
      %p125 = scmp.ne.s32.totalorder %s120, %s122
      %p126 = scmp.eq.s32.totalorder %s23, 0
      %p127 = por %p125, %p126
      %p128 = scmp.ne.s32.totalorder %s120, %s122
      %p129 = scmp.eq.s32.totalorder %s28, 1
      %p130 = por %p128, %p129
      %p131 = scmp.ne.s32.totalorder %s122, %s123
      %p132 = scmp.eq.s32.totalorder %s28, 0
      %p133 = por %p131, %p132
      %p134 = scmp.ne.s32.totalorder %s122, %s123
      %p135 = scmp.eq.s32.totalorder %s29, 1
      %p136 = por %p134, %p135
      %p138 = scmp.ne.s32.totalorder %s123, %s137
      %p139 = scmp.eq.s32.totalorder %s29, 0
      %p140 = por %p138, %p139
      %s142 = sadd.s32 %s141, 1
      %p145 = scmp.eq.s32.totalorder %s23, 1
      %p146 = scmp.ne.s32.totalorder %s141, %s143
      %p147 = scmp.eq.s32.totalorder %s23, 0
      %p148 = por %p146, %p147
      %p149 = scmp.ne.s32.totalorder %s141, %s143
      %p150 = scmp.eq.s32.totalorder %s28, 1
      %p151 = por %p149, %p150
      %p152 = scmp.ne.s32.totalorder %s143, %s144
      %p153 = scmp.eq.s32.totalorder %s28, 0
      %p154 = por %p152, %p153
      %p155 = scmp.ne.s32.totalorder %s143, %s144
      %p156 = scmp.eq.s32.totalorder %s29, 1
      %p157 = por %p155, %p156
      %p159 = scmp.ne.s32.totalorder %s144, %s158
      %p160 = scmp.eq.s32.totalorder %s29, 0
      %p161 = por %p159, %p160
      %s163 = sadd.s32 %s162, 1
      %p166 = scmp.eq.s32.totalorder %s23, 1
      %p167 = scmp.ne.s32.totalorder %s162, %s164
      %p168 = scmp.eq.s32.totalorder %s23, 0
      %p169 = por %p167, %p168
      %p170 = scmp.ne.s32.totalorder %s162, %s164
      %p171 = scmp.eq.s32.totalorder %s28, 1
      %p172 = por %p170, %p171
      %p173 = scmp.ne.s32.totalorder %s164, %s165
      %p174 = scmp.eq.s32.totalorder %s28, 0
      %p175 = por %p173, %p174
      %p176 = scmp.ne.s32.totalorder %s164, %s165
      %p177 = scmp.eq.s32.totalorder %s29, 1
      %p178 = por %p176, %p177
      %p180 = scmp.ne.s32.totalorder %s165, %s179
      %p181 = scmp.eq.s32.totalorder %s29, 0
      %p182 = por %p180, %p181
      %s184 = sadd.s32 %s183, 1
      %p187 = scmp.eq.s32.totalorder %s23, 1
      %p188 = scmp.ne.s32.totalorder %s183, %s185
      %p189 = scmp.eq.s32.totalorder %s23, 0
      %p190 = por %p188, %p189
      %p191 = scmp.ne.s32.totalorder %s183, %s185
      %p192 = scmp.eq.s32.totalorder %s28, 1
      %p193 = por %p191, %p192
      %p194 = scmp.ne.s32.totalorder %s185, %s186
      %p195 = scmp.eq.s32.totalorder %s28, 0
      %p196 = por %p194, %p195
      %p197 = scmp.ne.s32.totalorder %s185, %s186
      %p198 = scmp.eq.s32.totalorder %s29, 1
      %p199 = por %p197, %p198
      %p201 = scmp.ne.s32.totalorder %s186, %s200
      %p202 = scmp.eq.s32.totalorder %s29, 0
      %p203 = por %p201, %p202
      %s205 = sadd.s32 %s204, 1
      %p208 = scmp.eq.s32.totalorder %s23, 1
      %p209 = scmp.ne.s32.totalorder %s204, %s206
      %p210 = scmp.eq.s32.totalorder %s23, 0
      %p211 = por %p209, %p210
      %p212 = scmp.ne.s32.totalorder %s204, %s206
      %p213 = scmp.eq.s32.totalorder %s28, 1
      %p214 = por %p212, %p213
      %p215 = scmp.ne.s32.totalorder %s206, %s207
      %p216 = scmp.eq.s32.totalorder %s28, 0
      %p217 = por %p215, %p216
      %p218 = scmp.ne.s32.totalorder %s206, %s207
      %p219 = scmp.eq.s32.totalorder %s29, 1
      %p220 = por %p218, %p219
      %p222 = scmp.ne.s32.totalorder %s207, %s221
      %p223 = scmp.eq.s32.totalorder %s29, 0
      %p224 = por %p222, %p223
      %s226 = sadd.s32 %s225, 1
      %p229 = scmp.eq.s32.totalorder %s23, 1
      %p230 = scmp.ne.s32.totalorder %s225, %s227
      %p231 = scmp.eq.s32.totalorder %s23, 0
      %p232 = por %p230, %p231
      %p233 = scmp.ne.s32.totalorder %s225, %s227
      %p234 = scmp.eq.s32.totalorder %s28, 1
      %p235 = por %p233, %p234
      %p236 = scmp.ne.s32.totalorder %s227, %s228
      %p237 = scmp.eq.s32.totalorder %s28, 0
      %p238 = por %p236, %p237
      %p239 = scmp.ne.s32.totalorder %s227, %s228
      %p240 = scmp.eq.s32.totalorder %s29, 1
      %p241 = por %p239, %p240
      %p243 = scmp.ne.s32.totalorder %s228, %s242
      %p244 = scmp.eq.s32.totalorder %s29, 0
      %p245 = por %p243, %p244
      %s247 = sadd.s32 %s246, 1
      %p250 = scmp.eq.s32.totalorder %s23, 1
      %p251 = scmp.ne.s32.totalorder %s246, %s248
      %p252 = scmp.eq.s32.totalorder %s23, 0
      %p253 = por %p251, %p252
      %p254 = scmp.ne.s32.totalorder %s246, %s248
      %p255 = scmp.eq.s32.totalorder %s28, 1
      %p256 = por %p254, %p255
      %p257 = scmp.ne.s32.totalorder %s248, %s249
      %p258 = scmp.eq.s32.totalorder %s28, 0
      %p259 = por %p257, %p258
      %p260 = scmp.ne.s32.totalorder %s248, %s249
      %p261 = scmp.eq.s32.totalorder %s29, 1
      %p262 = por %p260, %p261
      %p264 = scmp.ne.s32.totalorder %s249, %s263
      %p265 = scmp.eq.s32.totalorder %s29, 0
      %p266 = por %p264, %p265
      %s267 = ssub.s32 %s23, %s30
      %p268 = scmp.eq.s32.totalorder %s267, 0
      %s270 = sadd.s32 %s269, 1
      %s271 = scalar_select %p268, %s269, %s270
      %p274 = pneg %p268
      %p275 = scmp.eq.s32.totalorder %s23, 1
      %p276 = por %p274, %p275
      %p277 = scmp.ne.s32.totalorder %s269, %s272
      %p278 = scmp.eq.s32.totalorder %s23, 0
      %p279 = por %p277, %p278
      %p280 = scmp.ne.s32.totalorder %s269, %s272
      %p281 = scmp.eq.s32.totalorder %s28, 1
      %p282 = por %p280, %p281
      %p283 = scmp.ne.s32.totalorder %s272, %s273
      %p284 = scmp.eq.s32.totalorder %s28, 0
      %p285 = por %p283, %p284
      %p286 = scmp.ne.s32.totalorder %s272, %s273
      %p287 = scmp.eq.s32.totalorder %s29, 1
      %p288 = por %p286, %p287
      %p290 = scmp.ne.s32.totalorder %s273, %s289
      %p291 = scmp.eq.s32.totalorder %s29, 0
      %p292 = por %p290, %p291
      %p293 = scmp.le.s32.totalorder 1, %s23
      %p294 = scmp.lt.s32.totalorder %s23, 3
      %p295 = pnand %p293, %p294
      %p296 = pneg %p295
      // Predicated region
      $region9: #{tpu_custom_call.1} parent=5 // pred_check
        _
      $region10: #{tpu_custom_call.1} parent=5 // pred_check_branch
        %298 = sbr.rel (%p295) target = $region12
      $region11: #{tpu_custom_call.1} parent=5 // pred_region
        %s299 = ssub.s32 %s23, 1
        // Predicated region
        $region13: #{tpu_custom_call.1} parent=11 // pred_check
          %p300 = pneg %p70
        $region14: #{tpu_custom_call.1} parent=11 // pred_check_branch
          %302 = sbr.rel (%p300) target = $region16
        $region15: #{tpu_custom_call.1} parent=11 // pred_region
          _
        $region16: #{tpu_custom_call.1} parent=11 // pred_fallthru
          _
        // Predicated region
        $region17: #{tpu_custom_call.1} parent=11 // pred_check
          %p303 = pneg %p91
        $region18: #{tpu_custom_call.1} parent=11 // pred_check_branch
          %305 = sbr.rel (%p303) target = $region20
        $region19: #{tpu_custom_call.1} parent=11 // pred_region
          _
        $region20: #{tpu_custom_call.1} parent=11 // pred_fallthru
          _
        // Predicated region
        $region21: #{tpu_custom_call.1} parent=11 // pred_check
          %p306 = pneg %p112
        $region22: #{tpu_custom_call.1} parent=11 // pred_check_branch
          %308 = sbr.rel (%p306) target = $region24
        $region23: #{tpu_custom_call.1} parent=11 // pred_region
          %s310 = ssub.s32 256, 256
          %311 = vsyncadd [#allocation4], %s310
          %s312 = sshll.u32 [#allocation3], 4
          %s313 = int_to_ptr.vmem [resolvable:$true] %s312
          %318 = dma.hbm_to_vmem [thread:$0]  %s3, 256, %s313, [#allocation4], 64, 64, 4
        $region24: #{tpu_custom_call.1} parent=11 // pred_fallthru
          _
        // Predicated region
        $region25: #{tpu_custom_call.1} parent=11 // pred_check
          %p319 = pneg %p133
        $region26: #{tpu_custom_call.1} parent=11 // pred_check_branch
          %321 = sbr.rel (%p319) target = $region28
        $region27: #{tpu_custom_call.1} parent=11 // pred_region
          _
        $region28: #{tpu_custom_call.1} parent=11 // pred_fallthru
          _
        // Predicated region
        $region29: #{tpu_custom_call.1} parent=11 // pred_check
          %p322 = pneg %p154
        $region30: #{tpu_custom_call.1} parent=11 // pred_check_branch
          %324 = sbr.rel (%p322) target = $region32
        $region31: #{tpu_custom_call.1} parent=11 // pred_region
          _
        $region32: #{tpu_custom_call.1} parent=11 // pred_fallthru
          _
        // Predicated region
        $region33: #{tpu_custom_call.1} parent=11 // pred_check
          %p325 = pneg %p175
        $region34: #{tpu_custom_call.1} parent=11 // pred_check_branch
          %327 = sbr.rel (%p325) target = $region36
        $region35: #{tpu_custom_call.1} parent=11 // pred_region
          _
        $region36: #{tpu_custom_call.1} parent=11 // pred_fallthru
          _
        // Predicated region
        $region37: #{tpu_custom_call.1} parent=11 // pred_check
          %p328 = pneg %p196
        $region38: #{tpu_custom_call.1} parent=11 // pred_check_branch
          %330 = sbr.rel (%p328) target = $region40
        $region39: #{tpu_custom_call.1} parent=11 // pred_region
          _
        $region40: #{tpu_custom_call.1} parent=11 // pred_fallthru
          _
        // Predicated region
        $region41: #{tpu_custom_call.1} parent=11 // pred_check
          %p331 = pneg %p217
        $region42: #{tpu_custom_call.1} parent=11 // pred_check_branch
          %333 = sbr.rel (%p331) target = $region44
        $region43: #{tpu_custom_call.1} parent=11 // pred_region
          _
        $region44: #{tpu_custom_call.1} parent=11 // pred_fallthru
          _
        // Predicated region
        $region45: #{tpu_custom_call.1} parent=11 // pred_check
          %p334 = pneg %p238
        $region46: #{tpu_custom_call.1} parent=11 // pred_check_branch
          %336 = sbr.rel (%p334) target = $region48
        $region47: #{tpu_custom_call.1} parent=11 // pred_region
          _
        $region48: #{tpu_custom_call.1} parent=11 // pred_fallthru
          _
        // Predicated region
        $region49: #{tpu_custom_call.1} parent=11 // pred_check
          %p337 = pneg %p259
        $region50: #{tpu_custom_call.1} parent=11 // pred_check_branch
          %339 = sbr.rel (%p337) target = $region52
        $region51: #{tpu_custom_call.1} parent=11 // pred_region
          _
        $region52: #{tpu_custom_call.1} parent=11 // pred_fallthru
          _
      $region12: #{tpu_custom_call.1} parent=5 // pred_fallthru
        _
      %p340 = scmp.lt.s32.totalorder %s23, 2
      // Predicated region
      $region53: #{tpu_custom_call.1} parent=5 // pred_check
        %p341 = pneg %p340
      $region54: #{tpu_custom_call.1} parent=5 // pred_check_branch
        %343 = sbr.rel (%p341) target = $region56
      $region55: #{tpu_custom_call.1} parent=5 // pred_region
        // Predicated region
        $region57: #{tpu_custom_call.1} parent=55 // pred_check
          %p344 = pneg %p43
        $region58: #{tpu_custom_call.1} parent=55 // pred_check_branch
          %346 = sbr.rel (%p344) target = $region60
        $region59: #{tpu_custom_call.1} parent=55 // pred_region
          %p347 = scmp.lt.s32.totalorder %s23, 1
          %s348 = scalar_select %p347, %s23, 1
          %s349 = smul.addr %s348, 8
          %s350 = scalar_lea.vmem %s0, %s349
        $region60: #{tpu_custom_call.1} parent=55 // pred_fallthru
          _
      $region56: #{tpu_custom_call.1} parent=5 // pred_fallthru
        _
      %p351 = scmp.le.s32.totalorder 1, %s23
      %p352 = scmp.lt.s32.totalorder %s23, 3
      %p353 = pnand %p351, %p352
      %p354 = pneg %p353
      // Predicated region
      $region61: #{tpu_custom_call.1} parent=5 // pred_check
        _
      $region62: #{tpu_custom_call.1} parent=5 // pred_check_branch
        %356 = sbr.rel (%p353) target = $region64
      $region63: #{tpu_custom_call.1} parent=5 // pred_region
        %s357 = ssub.s32 %s23, 1
        // Predicated region
        $region65: #{tpu_custom_call.1} parent=63 // pred_check
          %p358 = pneg %p112
        $region66: #{tpu_custom_call.1} parent=63 // pred_check_branch
          %360 = sbr.rel (%p358) target = $region68
        $region67: #{tpu_custom_call.1} parent=63 // pred_region
          %361 = dma.done [#allocation4], 256
        $region68: #{tpu_custom_call.1} parent=63 // pred_fallthru
          _
        %p362 = scmp.lt.s32.totalorder %s28, 1
        %s363 = scalar_select %p362, %s28, 1
        %s364 = smul.addr %s363, 8
        %s365 = scalar_lea.vmem %s0, %s364
        %p366 = pneg %p49
        %p367 = pneg %p46
        %p368 = pneg %p70
        %p369 = pneg %p67
        %p370 = pneg %p91
        %p371 = pneg %p88
        %p372 = pneg %p112
        %p373 = pneg %p109
        %p374 = pneg %p133
        %p375 = pneg %p130
        %p376 = pneg %p154
        %p377 = pneg %p151
        %p378 = pneg %p175
        %p379 = pneg %p172
        %p380 = pneg %p196
        %p381 = pneg %p193
        %p382 = pneg %p217
        %p383 = pneg %p214
        %p384 = pneg %p238
        %p385 = pneg %p235
        %p386 = pneg %p259
        %p387 = pneg %p256
        %p388 = pneg %p285
        %p389 = pneg %p282
        %s390 = sand.u32 %s272, 1
        %s391 = scalar_lea.sflag [#allocation5], %s390
        %s392 = sand.u32 %s272, 1
        %s393 = smul.addr %s392, 8
        %s394 = scalar_lea.vmem [#allocation6], %s393
        %p395 = scmp.lt.s32.totalorder %s28, 1
        %s396 = scalar_select %p395, %s28, 1
        %s397 = smul.addr %s396, 8
        %s398 = scalar_lea.vmem %s0, %s397
        %v400 = vld [vmem:[%s398] sm:$0xff]
        %v401 = vpack.c.bf16 %v400, %v400
        %v402 = vld [vmem:[%s1] sm:$0xff]
        %v403 = vld [vmem:[%s1 + $0x8] sm:$0xff]
        %v404 = vld [vmem:[%s1 + $0x10] sm:$0xff]
        %v405 = vld [vmem:[%s1 + $0x18] sm:$0xff]
        %v406 = vld [vmem:[%s2] sm:$0x3]
        %v408 = vlaneseq
        %v409 = vshrl.u32 %v408, 7
        %v410 = vsub.s32 0, %v409
        %v411 = vrot.slane %v406, %v410
        %v417 = vunpack.c.l.b16 %v402
        %v418 = vunpack.c.h.b16 %v402
        %v419 = vunpack.c.l.b16 %v403
        %v420 = vunpack.c.h.b16 %v403
        %v421 = vunpack.c.l.b16 %v404
        %v422 = vunpack.c.h.b16 %v404
        %v423 = vunpack.c.l.b16 %v405
        %v424 = vunpack.c.h.b16 %v405
        %v425 = vpack.c.b16 %v419, %v417
        %v426 = vpack.c.b16 %v420, %v418
        %v427 = vpack.c.b16 %v423, %v421
        %v428 = vpack.c.b16 %v424, %v422
        %vm433 = vcmask 261120
        %v435 = vsel %vm433, %v401, 0
        %437 = vmatprep.subr.bf16.mxu0 %v426
        %438 = vmatpush1.bf16.msra.mxu0 %v425
        %439 = vmatprep.subr.bf16.mxu0 %v428
        %440 = vmatpush1.bf16.msra.mxu0 %v427
        %441 = vmatprep.subr.bf16.mxu0 0
        %442 = vmatpush1.bf16.msra.mxu0 0
        %443 = vmatprep.subr.bf16.mxu0 0
        %444 = vmatpush1.bf16.msra.mxu0 0
        %445 = vmatprep.subr.bf16.mxu0 0
        %446 = vmatpush1.bf16.msra.mxu0 0
        %447 = vmatprep.subr.bf16.mxu0 0
        %448 = vmatpush1.bf16.msra.mxu0 0
        %449 = vmatprep.subr.bf16.mxu0 0
        %450 = vmatpush1.bf16.msra.mxu0 0
        %451 = vmatprep.subr.bf16.mxu0 0
        %452 = vmatpush1.bf16.msra.mxu0 0
        %453 = vmatprep.subr.bf16.mxu0 0
        %454 = vmatpush1.bf16.msra.mxu0 0
        %455 = vmatprep.subr.bf16.mxu0 0
        %456 = vmatpush1.bf16.msra.mxu0 0
        %457 = vmatprep.subr.bf16.mxu0 0
        %458 = vmatpush1.bf16.msra.mxu0 0
        %459 = vmatprep.subr.bf16.mxu0 0
        %460 = vmatpush1.bf16.msra.mxu0 0
        %461 = vmatprep.subr.bf16.mxu0 0
        %462 = vmatpush1.bf16.msra.mxu0 0
        %463 = vmatprep.subr.bf16.mxu0 0
        %464 = vmatpush1.bf16.msra.mxu0 0
        %465 = vmatprep.subr.bf16.mxu0 0
        %466 = vmatpush1.bf16.msra.mxu0 0
        %467 = vmatprep.subr.bf16.mxu0 0
        %468 = vmatpush1.bf16.msra.mxu0 0
        %469 = vmatprep.mubr.bf16.mxu0 0
        %470 = vmatmul.mubr.bf16.gmra.mrb[0].mxu0 %v435
        %v471 = vpop.f32.mrb[0].mxu0
        %v472 = vadd.f32 %v411, %v471
        %v473 = vpop.f32.mrb[0].mxu0
        %v474 = vpop.f32.mrb[0].mxu0
        %v475 = vpop.f32.mrb[0].mxu0
        %476 = vdwg.mxu0
        %v477 = vmax.f32 %v472, 0.0
        %v478 = vpack.c.bf16 %v477, %v477
        %v479 = vld [vmem:[#allocation3] sm:$0xf]
        %v480 = vld [vmem:[#allocation3 + $0x4] sm:$0xf]
        %v481 = vld [vmem:[#allocation3 + $0x8] sm:$0xf]
        %v482 = vld [vmem:[#allocation3 + $0xc] sm:$0xf]
        %v483 = vld [vmem:[%s4] sm:$0x1]
        %v485 = vlaneseq
        %v486 = vshrl.u32 %v485, 7
        %v487 = vsub.s32 0, %v486
        %v488 = vrot.slane %v483, %v487
        %491 = vrot.lane.b32.xlu0 %v478, 96
        %v492 = vpop.permute.xlu0 %491
        %v497 = vunpack.c.l.b16 %v479
        %v498 = vunpack.c.l.b16 %v480
        %v499 = vunpack.c.l.b16 %v481
        %v500 = vunpack.c.l.b16 %v482
        %v501 = vpack.c.b16 %v498, %v497
        %v502 = vpack.c.b16 %v500, %v499
        %v506 = vsel %vm433, %v492, 0
        %508 = vmatprep.subr.bf16.mxu0 0
        %509 = vmatpush1.bf16.msra.mxu0 %v501
        %510 = vmatprep.subr.bf16.mxu0 0
        %511 = vmatpush1.bf16.msra.mxu0 %v502
        %512 = vmatprep.subr.bf16.mxu0 0
        %513 = vmatpush1.bf16.msra.mxu0 0
        %514 = vmatprep.subr.bf16.mxu0 0
        %515 = vmatpush1.bf16.msra.mxu0 0
        %516 = vmatprep.subr.bf16.mxu0 0
        %517 = vmatpush1.bf16.msra.mxu0 0
        %518 = vmatprep.subr.bf16.mxu0 0
        %519 = vmatpush1.bf16.msra.mxu0 0
        %520 = vmatprep.subr.bf16.mxu0 0
        %521 = vmatpush1.bf16.msra.mxu0 0
        %522 = vmatprep.subr.bf16.mxu0 0
        %523 = vmatpush1.bf16.msra.mxu0 0
        %524 = vmatprep.subr.bf16.mxu0 0
        %525 = vmatpush1.bf16.msra.mxu0 0
        %526 = vmatprep.subr.bf16.mxu0 0
        %527 = vmatpush1.bf16.msra.mxu0 0
        %528 = vmatprep.subr.bf16.mxu0 0
        %529 = vmatpush1.bf16.msra.mxu0 0
        %530 = vmatprep.subr.bf16.mxu0 0
        %531 = vmatpush1.bf16.msra.mxu0 0
        %532 = vmatprep.subr.bf16.mxu0 0
        %533 = vmatpush1.bf16.msra.mxu0 0
        %534 = vmatprep.subr.bf16.mxu0 0
        %535 = vmatpush1.bf16.msra.mxu0 0
        %536 = vmatprep.subr.bf16.mxu0 0
        %537 = vmatpush1.bf16.msra.mxu0 0
        %538 = vmatprep.subr.bf16.mxu0 0
        %539 = vmatpush1.bf16.msra.mxu0 0
        %540 = vmatprep.mubr.bf16.mxu0 0
        %541 = vmatmul.mubr.bf16.gmra.mrb[0].mxu0 %v506
        %v542 = vpop.f32.mrb[0].mxu0
        %v543 = vadd.f32 %v488, %v542
        %v544 = vpop.f32.mrb[0].mxu0
        %v545 = vpop.f32.mrb[0].mxu0
        %v546 = vpop.f32.mrb[0].mxu0
        %547 = vdwg.mxu0
        %v548 = vmax.f32 %v543, 0.0
        %v549 = vld [vmem:[%s5] sm:$0xf]
        %v550 = vld [vmem:[%s5 + $0x4] sm:$0xf]
        %v551 = vld [vmem:[%s5 + $0x8] sm:$0xf]
        %v552 = vld [vmem:[%s5 + $0xc] sm:$0xf]
        %v553 = vld [vmem:[%s6] sm:$0x1]
        %v555 = vlaneseq
        %v556 = vshrl.u32 %v555, 7
        %v557 = vsub.s32 0, %v556
        %v558 = vrot.slane %v553, %v557
        %v564 = vunpack.c.l.b16 %v549
        %v565 = vunpack.c.l.b16 %v550
        %v566 = vunpack.c.l.b16 %v551
        %v567 = vunpack.c.l.b16 %v552
        %v568 = vpack.c.b16 %v565, %v564
        %v569 = vpack.c.b16 %v567, %v566
        %v573 = vsel %vm433, %v478, 0
        %575 = vmatprep.subr.bf16.mxu0 0
        %576 = vmatpush1.bf16.msra.mxu0 %v568
        %577 = vmatprep.subr.bf16.mxu0 0
        %578 = vmatpush1.bf16.msra.mxu0 %v569
        %579 = vmatprep.subr.bf16.mxu0 0
        %580 = vmatpush1.bf16.msra.mxu0 0
        %581 = vmatprep.subr.bf16.mxu0 0
        %582 = vmatpush1.bf16.msra.mxu0 0
        %583 = vmatprep.subr.bf16.mxu0 0
        %584 = vmatpush1.bf16.msra.mxu0 0
        %585 = vmatprep.subr.bf16.mxu0 0
        %586 = vmatpush1.bf16.msra.mxu0 0
        %587 = vmatprep.subr.bf16.mxu0 0
        %588 = vmatpush1.bf16.msra.mxu0 0
        %589 = vmatprep.subr.bf16.mxu0 0
        %590 = vmatpush1.bf16.msra.mxu0 0
        %591 = vmatprep.subr.bf16.mxu0 0
        %592 = vmatpush1.bf16.msra.mxu0 0
        %593 = vmatprep.subr.bf16.mxu0 0
        %594 = vmatpush1.bf16.msra.mxu0 0
        %595 = vmatprep.subr.bf16.mxu0 0
        %596 = vmatpush1.bf16.msra.mxu0 0
        %597 = vmatprep.subr.bf16.mxu0 0
        %598 = vmatpush1.bf16.msra.mxu0 0
        %599 = vmatprep.subr.bf16.mxu0 0
        %600 = vmatpush1.bf16.msra.mxu0 0
        %601 = vmatprep.subr.bf16.mxu0 0
        %602 = vmatpush1.bf16.msra.mxu0 0
        %603 = vmatprep.subr.bf16.mxu0 0
        %604 = vmatpush1.bf16.msra.mxu0 0
        %605 = vmatprep.subr.bf16.mxu0 0
        %606 = vmatpush1.bf16.msra.mxu0 0
        %607 = vmatprep.mubr.bf16.mxu0 0
        %608 = vmatmul.mubr.bf16.gmra.mrb[0].mxu0 %v573
        %v609 = vpop.f32.mrb[0].mxu0
        %v610 = vadd.f32 %v558, %v609
        %v611 = vpop.f32.mrb[0].mxu0
        %v612 = vpop.f32.mrb[0].mxu0
        %v613 = vpop.f32.mrb[0].mxu0
        %614 = vdwg.mxu0
        %v615 = vpack.c.bf16 %v548, %v548
        %v616 = vld [vmem:[%s7] sm:$0xf]
        %v617 = vld [vmem:[%s7 + $0x4] sm:$0xf]
        %v618 = vld [vmem:[%s7 + $0x8] sm:$0xf]
        %v619 = vld [vmem:[%s7 + $0xc] sm:$0xf]
        %v620 = vld [vmem:[%s8] sm:$0x1]
        %v622 = vlaneseq
        %v623 = vshrl.u32 %v622, 7
        %v624 = vsub.s32 0, %v623
        %v625 = vrot.slane %v620, %v624
        %v631 = vunpack.c.l.b16 %v616
        %v632 = vunpack.c.l.b16 %v617
        %v633 = vunpack.c.l.b16 %v618
        %v634 = vunpack.c.l.b16 %v619
        %v635 = vpack.c.b16 %v632, %v631
        %v636 = vpack.c.b16 %v634, %v633
        %v640 = vsel %vm433, %v615, 0
        %642 = vmatprep.subr.bf16.mxu0 0
        %643 = vmatpush1.bf16.msra.mxu0 %v635
        %644 = vmatprep.subr.bf16.mxu0 0
        %645 = vmatpush1.bf16.msra.mxu0 %v636
        %646 = vmatprep.subr.bf16.mxu0 0
        %647 = vmatpush1.bf16.msra.mxu0 0
        %648 = vmatprep.subr.bf16.mxu0 0
        %649 = vmatpush1.bf16.msra.mxu0 0
        %650 = vmatprep.subr.bf16.mxu0 0
        %651 = vmatpush1.bf16.msra.mxu0 0
        %652 = vmatprep.subr.bf16.mxu0 0
        %653 = vmatpush1.bf16.msra.mxu0 0
        %654 = vmatprep.subr.bf16.mxu0 0
        %655 = vmatpush1.bf16.msra.mxu0 0
        %656 = vmatprep.subr.bf16.mxu0 0
        %657 = vmatpush1.bf16.msra.mxu0 0
        %658 = vmatprep.subr.bf16.mxu0 0
        %659 = vmatpush1.bf16.msra.mxu0 0
        %660 = vmatprep.subr.bf16.mxu0 0
        %661 = vmatpush1.bf16.msra.mxu0 0
        %662 = vmatprep.subr.bf16.mxu0 0
        %663 = vmatpush1.bf16.msra.mxu0 0
        %664 = vmatprep.subr.bf16.mxu0 0
        %665 = vmatpush1.bf16.msra.mxu0 0
        %666 = vmatprep.subr.bf16.mxu0 0
        %667 = vmatpush1.bf16.msra.mxu0 0
        %668 = vmatprep.subr.bf16.mxu0 0
        %669 = vmatpush1.bf16.msra.mxu0 0
        %670 = vmatprep.subr.bf16.mxu0 0
        %671 = vmatpush1.bf16.msra.mxu0 0
        %672 = vmatprep.subr.bf16.mxu0 0
        %673 = vmatpush1.bf16.msra.mxu0 0
        %674 = vmatprep.mubr.bf16.mxu0 0
        %675 = vmatmul.mubr.bf16.gmra.mrb[0].mxu0 %v640
        %v676 = vpop.f32.mrb[0].mxu0
        %v677 = vadd.f32 %v625, %v676
        %v678 = vpop.f32.mrb[0].mxu0
        %v679 = vpop.f32.mrb[0].mxu0
        %v680 = vpop.f32.mrb[0].mxu0
        %681 = vdwg.mxu0
        %v682 = vld [vmem:[%s9] sm:$0xf]
        %v683 = vld [vmem:[%s9 + $0x4] sm:$0xf]
        %v684 = vld [vmem:[#allocation2] sm:$0x1]
        %v686 = vlaneseq
        %v687 = vshrl.u32 %v686, 7
        %v688 = vsub.s32 0, %v687
        %v689 = vrot.slane %v684, %v688
        %691 = vrot.lane.b32.xlu0 %v478, 64
        %v692 = vpop.permute.xlu0 %691
        %v695 = vunpack.c.l.b16 %v682
        %v696 = vunpack.c.l.b16 %v683
        %v697 = vpack.c.b16 %v696, %v695
        %vm699 = vcmask 130048
        %v701 = vsel %vm699, %v692, 0
        %703 = vmatprep.subr.bf16.mxu0 0
        %704 = vmatpush1.bf16.msra.mxu0 %v697
        %705 = vmatprep.subr.bf16.mxu0 0
        %706 = vmatpush1.bf16.msra.mxu0 0
        %707 = vmatprep.subr.bf16.mxu0 0
        %708 = vmatpush1.bf16.msra.mxu0 0
        %709 = vmatprep.subr.bf16.mxu0 0
        %710 = vmatpush1.bf16.msra.mxu0 0
        %711 = vmatprep.subr.bf16.mxu0 0
        %712 = vmatpush1.bf16.msra.mxu0 0
        %713 = vmatprep.subr.bf16.mxu0 0
        %714 = vmatpush1.bf16.msra.mxu0 0
        %715 = vmatprep.subr.bf16.mxu0 0
        %716 = vmatpush1.bf16.msra.mxu0 0
        %717 = vmatprep.subr.bf16.mxu0 0
        %718 = vmatpush1.bf16.msra.mxu0 0
        %719 = vmatprep.subr.bf16.mxu0 0
        %720 = vmatpush1.bf16.msra.mxu0 0
        %721 = vmatprep.subr.bf16.mxu0 0
        %722 = vmatpush1.bf16.msra.mxu0 0
        %723 = vmatprep.subr.bf16.mxu0 0
        %724 = vmatpush1.bf16.msra.mxu0 0
        %725 = vmatprep.subr.bf16.mxu0 0
        %726 = vmatpush1.bf16.msra.mxu0 0
        %727 = vmatprep.subr.bf16.mxu0 0
        %728 = vmatpush1.bf16.msra.mxu0 0
        %729 = vmatprep.subr.bf16.mxu0 0
        %730 = vmatpush1.bf16.msra.mxu0 0
        %731 = vmatprep.subr.bf16.mxu0 0
        %732 = vmatpush1.bf16.msra.mxu0 0
        %733 = vmatprep.subr.bf16.mxu0 0
        %734 = vmatpush1.bf16.msra.mxu0 0
        %735 = vmatprep.mubr.bf16.mxu0 0
        %736 = vmatmul.mubr.bf16.gmra.mrb[0].mxu0 %v701
        %v737 = vpop.f32.mrb[0].mxu0
        %v738 = vadd.f32 %v689, %v737
        %v739 = vpop.f32.mrb[0].mxu0
        %v740 = vpop.f32.mrb[0].mxu0
        %v741 = vpop.f32.mrb[0].mxu0
        %742 = vdwg.mxu0
        %v743 = vxor.u32 %v677, 2147483648
        %v744 = vmul.f32 %v743, 1.442695
        %v745 = vpow.pop %v744
        %v746 = vadd.f32 %v745, 1.0
        %v747 = vrcp.pop %v746
        %v748 = vmul.f32 1.0, %v747
        %v749 = vmul.f32 %v748, 0.5
        %751 = vrot.lane.b32.xlu0 %v749, 126
        %v752 = vpop.permute.xlu0 %751
        %v754 = vsub.f32 %v748, %v752
        %v755 = vmax.f32 %v754, 0.0
        %v756 = vmin.f32 %v755, 1.0
        %v757 = vadd.f32 %v748, %v752
        %v758 = vmax.f32 %v757, 0.0
        %v759 = vmin.f32 %v758, 1.0
        %v760 = vadd.f32 %v756, 0.01
        %v761 = vmax.f32 %v759, %v760
        %763 = vrot.lane.b32.xlu0 %v756, 4
        %v764 = vpop.permute.xlu0 %763
        %767 = vrot.lane.b32.xlu0 %v761, 6
        %v768 = vpop.permute.xlu0 %767
        %771 = vrot.lane.b32.xlu0 %v738, 8
        %v772 = vpop.permute.xlu0 %771
        %775 = vrot.lane.b32.xlu0 %v472, 57
        %v776 = vpop.permute.xlu0 %775
        %vm778 = vcmask 31744
        %v779 = vsel %vm778, %v610, %v764
        %vm780 = vcmask 48128
        %v781 = vsel %vm780, %v779, %v768
        %vm782 = vcmask 64512
        %v783 = vsel %vm782, %v781, %v772
        %vm784 = vcmask 72704
        %v785 = vsel %vm784, %v783, %v776
        %vm786 = vcmask 80896
        %v787 = vsel %vm786, %v785, 0.0
        %788 = vst [vmem:[%s394] sm:$0xff] %v787
        %s789 = sand.u32 %s272, 1
        %s790 = scalar_lea.sflag [#allocation5], %s789
        %s791 = sand.u32 %s272, 1
        %s792 = smul.addr %s791, 8
        %s793 = scalar_lea.vmem [#allocation6], %s792
        // Predicated region
        $region69: #{tpu_custom_call.1} parent=63 // pred_check
          %p794 = pneg %p282
        $region70: #{tpu_custom_call.1} parent=63 // pred_check_branch
          %796 = sbr.rel (%p794) target = $region72
        $region71: #{tpu_custom_call.1} parent=63 // pred_region
          %s798 = ssub.s32 128, 128
          %799 = vsyncadd %s790, %s798
          %s800 = smul.addr %s28, 128
          %s801 = scalar_lea.hbm %s11, %s800
          %s803 = sshll.u32 %s793, 4
          %s804 = int_to_ptr.vmem [resolvable:$true] %s803
          %806 = dma.vmem_to_hbm [thread:$0]  %s804, 128, %s801, %s790
        $region72: #{tpu_custom_call.1} parent=63 // pred_fallthru
          _
      $region64: #{tpu_custom_call.1} parent=5 // pred_fallthru
        _
      %p807 = scmp.le.s32.totalorder 2, %s23
      // Predicated region
      $region73: #{tpu_custom_call.1} parent=5 // pred_check
        %p808 = pneg %p807
      $region74: #{tpu_custom_call.1} parent=5 // pred_check_branch
        %810 = sbr.rel (%p808) target = $region76
      $region75: #{tpu_custom_call.1} parent=5 // pred_region
        %s811 = ssub.s32 %s23, 2
        // Predicated region
        $region77: #{tpu_custom_call.1} parent=75 // pred_check
          %p812 = pneg %p288
        $region78: #{tpu_custom_call.1} parent=75 // pred_check_branch
          %814 = sbr.rel (%p812) target = $region80
        $region79: #{tpu_custom_call.1} parent=75 // pred_region
          %s815 = sand.u32 %s273, 1
          %s816 = scalar_lea.sflag [#allocation5], %s815
          %s817 = sand.u32 %s273, 1
          %s818 = smul.addr %s817, 8
          %s819 = scalar_lea.vmem [#allocation6], %s818
          %820 = dma.done %s816, 128
        $region80: #{tpu_custom_call.1} parent=75 // pred_fallthru
          _
      $region76: #{tpu_custom_call.1} parent=5 // pred_fallthru
        _
    $region6: #{tpu_custom_call.1} parent=1 // loop_footer
      %s27 = sadd.s32 1, %s23
    $region7: #{tpu_custom_call.1} parent=1 // loop_footer_branch
      %22 = sbr.rel target = $region3
    $region8: #{tpu_custom_call.1} parent=1 // loop_exit
      _
    %821 = vsyncpa [#allocation4], 1
    %s822 = scalar_lea.sflag [#allocation4], 1
    %823 = vsyncpa %s822, 1
    %824 = vsyncpa [#allocation5], 1
    %s825 = scalar_lea.sflag [#allocation5], 1
    %826 = vsyncpa %s825, 1

</llo_original>
